<compile_context>
chip_gen: v7x
topology: tpu7x:2x2x1
jax: 0.10.0
libtpu: 0.0.40
codegen_flags: <defaults>
</compile_context>

<pallas_src>
import functools

import numpy as np
import jax
import jax.numpy as jnp
from jax.experimental import pallas as pl
from jax.experimental.pallas import tpu as pltpu

EPS = 1e-5  # nn.InstanceNorm2d default (affine=False, track_running_stats=False)


def _tap_masks(H, W):
    """(8, H*W) f32 masks for the 8 non-center taps: 1.0 where the tap reads
    inside the image (zero padding).  Order: dh-major, center (0,0) skipped."""
    h = np.arange(H)[:, None]
    w = np.arange(W)[None, :]
    rows = []
    for dh in (-1, 0, 1):
        for dw in (-1, 0, 1):
            if dh == 0 and dw == 0:
                continue
            valid = (h + dh >= 0) & (h + dh < H) & (w + dw >= 0) & (w + dw < W)
            rows.append(valid.reshape(-1))
    return jnp.asarray(np.stack(rows).astype(np.float32))  # (8, HW)


def residual_block_kernel(mask_ref, x_ref, w1_ref, w2_ref, out_ref, *, H, W):
    # mask_ref : (8, H*W)    zero-padding masks for the 8 non-center taps
    # x_ref    : (R, H*W)    R = images_per_group * C; each sublane row is one
    #                        (image, channel) plane, spatial on lanes
    # w1/w2    : (9, R, R)   per-tap block-diagonal weights [tap, row_out, row_in]
    # out_ref  : (R, H*W)
    HW = H * W
    x = x_ref[...].astype(jnp.float32)                          # (R, HW)

    # Load the 8 boundary masks once; reused by both convs.
    tap_masks = [mask_ref[t:t + 1, :] for t in range(8)]        # each (1, HW)

    def conv3x3(inp, w_ref):
        # Center tap first: no roll, no mask, no bias (bias cancels in the
        # affine-less InstanceNorm that follows) -> accumulator init.
        acc = jnp.dot(w_ref[4].astype(jnp.float32), inp,
                      preferred_element_type=jnp.float32)
        for tap in (0, 1, 2, 3, 5, 6, 7, 8):
            dh = tap // 3 - 1
            dw = tap % 3 - 1
            off = dh * W + dw                       # flat-index shift of this tap
            m = tap if tap < 4 else tap - 1         # row in the (8, HW) mask block
            part = pltpu.roll(inp, (-off) % HW, 1) * tap_masks[m]
            acc = acc + jnp.dot(w_ref[tap].astype(jnp.float32), part,
                                preferred_element_type=jnp.float32)
        return acc                                              # (R, HW) f32

    def instance_norm(y):
        # Each sublane row is one (image, channel) plane -> per-instance,
        # per-channel statistics over the lane (spatial) axis.
        m = jnp.mean(y, axis=1, keepdims=True)
        v = jnp.mean((y - m) ** 2, axis=1, keepdims=True)
        return (y - m) * jax.lax.rsqrt(v + EPS)

    h1 = jnp.maximum(instance_norm(conv3x3(x, w1_ref)), 0.0)
    h2 = instance_norm(conv3x3(h1, w2_ref))
    out_ref[...] = (x + h2).astype(out_ref.dtype)               # residual add


def _num_grid_groups(N):
    """Grid steps: 1 on single-TC chips (v5e/v6e) -> batch fully collapsed;
    2 on v7x so the second TensorCore gets the other half of the batch."""
    try:
        kind = jax.devices()[0].device_kind.lower()
    except Exception:
        kind = ""
    cores = 2 if ("v7" in kind or "7x" in kind) else 1
    g = max(1, min(N, cores))
    while N % g:
        g -= 1
    return g


@functools.partial(jax.jit, static_argnames=("num_groups",))
def _residual_block_impl(x_nchw, w1_oihw, w2_oihw, *, num_groups):
    N, C, H, W = x_nchw.shape
    HW = H * W
    ipg = N // num_groups          # images per grid group (stacked on sublanes)
    R = ipg * C                    # sublane rows per block

    # Free reshape of contiguous NCHW: (N, C, HW) -> (groups, ipg*C, HW).
    x_blk = x_nchw.reshape(num_groups, R, HW)

    # OIHW -> (tap=kh*3+kw, C_out, C_in), then block-diagonal replication so a
    # single (R, R) @ (R, HW) dot convolves all images in the group at once.
    def to_block_diag(w_oihw):
        w_t = jnp.transpose(w_oihw, (2, 3, 0, 1)).reshape(9, C, C)
        eye = jnp.eye(ipg, dtype=w_t.dtype)
        return jnp.einsum("gh,toi->tgohi", eye, w_t).reshape(9, R, R)

    w1_bd = to_block_diag(w1_oihw)
    w2_bd = to_block_diag(w2_oihw)
    masks = _tap_masks(H, W)                                    # (8, HW) constant

    kernel = functools.partial(residual_block_kernel, H=H, W=W)

    out_blk = pl.pallas_call(
        kernel,
        out_shape=jax.ShapeDtypeStruct((num_groups, R, HW), x_nchw.dtype),
        grid_spec=pltpu.PrefetchScalarGridSpec(
            num_scalar_prefetch=0,
            grid=(num_groups,),
            in_specs=[
                pl.BlockSpec((8, HW), lambda g: (0, 0)),            # tap masks
                pl.BlockSpec((None, R, HW), lambda g: (g, 0, 0)),   # image group
                pl.BlockSpec((9, R, R), lambda g: (0, 0, 0)),       # conv1 weights
                pl.BlockSpec((9, R, R), lambda g: (0, 0, 0)),       # conv2 weights
            ],
            out_specs=pl.BlockSpec((None, R, HW), lambda g: (g, 0, 0)),
        ),
        compiler_params=pltpu.CompilerParams(
            dimension_semantics=("parallel",)),
    )(masks, x_blk, w1_bd, w2_bd)

    return out_blk.reshape(N, C, H, W)


def residual_block(x_nchw, w1_oihw, b1, w2_oihw, b2):
    """Matches PyTorch ResidualBlock.forward.  The conv biases (b1, b2) are
    accepted for parameter parity but are mathematically cancelled by the
    affine-less InstanceNorm layers, so they are never loaded by the kernel."""
    del b1, b2  # exactly cancelled by InstanceNorm(affine=False)
    N = x_nchw.shape[0]
    return _residual_block_impl(x_nchw, w1_oihw, w2_oihw,
                                num_groups=_num_grid_groups(N))


def ref_residual_block(x_nchw, w1_oihw, b1, w2_oihw, b2):
    """Pure-JAX reference matching PyTorch semantics (biases included)."""
    def conv(x, w, b):
        y = jax.lax.conv_general_dilated(
            x, w, window_strides=(1, 1), padding=((1, 1), (1, 1)),
            dimension_numbers=("NCHW", "OIHW", "NCHW"))
        return y + b[None, :, None, None]

    def inorm(y):
        m = jnp.mean(y, axis=(2, 3), keepdims=True)
        v = jnp.mean((y - m) ** 2, axis=(2, 3), keepdims=True)
        return (y - m) * jax.lax.rsqrt(v + EPS)

    h = jnp.maximum(inorm(conv(x_nchw, w1_oihw, b1)), 0.0)
    h = inorm(conv(h, w2_oihw, b2))
    return x_nchw + h


if __name__ == "__main__":
    N, C, H, W = 2, 4, 16, 16
    key = jax.random.PRNGKey(0)
    kx, k1, k2, k3, k4 = jax.random.split(key, 5)

    x = jax.random.normal(kx, (N, C, H, W), jnp.float32)
    # Conv2d(in_features, in_features, 3) params in PyTorch OIHW layout.
    w1_oihw = 0.1 * jax.random.normal(k1, (C, C, 3, 3), jnp.float32)
    b1 = 0.1 * jax.random.normal(k2, (C,), jnp.float32)
    w2_oihw = 0.1 * jax.random.normal(k3, (C, C, 3, 3), jnp.float32)
    b2 = 0.1 * jax.random.normal(k4, (C,), jnp.float32)

    out = jax.block_until_ready(residual_block(x, w1_oihw, b1, w2_oihw, b2))
    ref = ref_residual_block(x, w1_oihw, b1, w2_oihw, b2)

    assert out.shape == (N, C, H, W)
    assert jnp.allclose(out, ref, atol=1e-3, rtol=1e-3), "mismatch vs reference"

    print("KERNEL_OK")
</pallas_src>

<mosaic_0001>
module attributes {stable_mosaic.version = 11 : i64} {
  func.func @residual_block_kernel(%arg0: i32, %arg1: memref<8x256xf32, #tpu.memory_space<vmem>>, %arg2: memref<1x8x256xf32, #tpu.memory_space<vmem>>, %arg3: memref<9x8x8xf32, #tpu.memory_space<vmem>>, %arg4: memref<9x8x8xf32, #tpu.memory_space<vmem>>, %arg5: memref<1x8x256xf32, #tpu.memory_space<vmem>>) attributes {dimension_semantics = [#tpu.dimension_semantics<parallel>], iteration_bounds = array<i64: 1>, scalar_prefetch = 0 : i64, scratch_operands = 0 : i64, tpu.core_type = #tpu.core_type<tc>, window_params = [{pipeline_mode = #tpu.pipeline_mode<synchronous>, transform_indices = @transform_0, window_bounds = array<i64: 8, 256>}, {transform_indices = @transform_1, window_bounds = array<i64: 1, 8, 256>}, {pipeline_mode = #tpu.pipeline_mode<synchronous>, transform_indices = @transform_2, window_bounds = array<i64: 9, 8, 8>}, {pipeline_mode = #tpu.pipeline_mode<synchronous>, transform_indices = @transform_3, window_bounds = array<i64: 9, 8, 8>}, {transform_indices = @transform_4, window_bounds = array<i64: 1, 8, 256>}]} {
    %c0 = arith.constant 0 : index
    %c0_0 = arith.constant 0 : index
    %c0_1 = arith.constant 0 : index
    %0 = vector.load %arg2[%c0, %c0_0, %c0_1] : memref<1x8x256xf32, #tpu.memory_space<vmem>>, vector<1x8x256xf32>
    %1 = vector.shape_cast %0 : vector<1x8x256xf32> to vector<8x256xf32>
    %c0_2 = arith.constant 0 : index
    %c0_3 = arith.constant 0 : index
    %2 = vector.load %arg1[%c0_2, %c0_3] : memref<8x256xf32, #tpu.memory_space<vmem>>, vector<1x256xf32>
    %c1 = arith.constant 1 : index
    %c0_4 = arith.constant 0 : index
    %3 = vector.load %arg1[%c1, %c0_4] : memref<8x256xf32, #tpu.memory_space<vmem>>, vector<1x256xf32>
    %c2 = arith.constant 2 : index
    %c0_5 = arith.constant 0 : index
    %4 = vector.load %arg1[%c2, %c0_5] : memref<8x256xf32, #tpu.memory_space<vmem>>, vector<1x256xf32>
    %c3 = arith.constant 3 : index
    %c0_6 = arith.constant 0 : index
    %5 = vector.load %arg1[%c3, %c0_6] : memref<8x256xf32, #tpu.memory_space<vmem>>, vector<1x256xf32>
    %c4 = arith.constant 4 : index
    %c0_7 = arith.constant 0 : index
    %6 = vector.load %arg1[%c4, %c0_7] : memref<8x256xf32, #tpu.memory_space<vmem>>, vector<1x256xf32>
    %c5 = arith.constant 5 : index
    %c0_8 = arith.constant 0 : index
    %7 = vector.load %arg1[%c5, %c0_8] : memref<8x256xf32, #tpu.memory_space<vmem>>, vector<1x256xf32>
    %c6 = arith.constant 6 : index
    %c0_9 = arith.constant 0 : index
    %8 = vector.load %arg1[%c6, %c0_9] : memref<8x256xf32, #tpu.memory_space<vmem>>, vector<1x256xf32>
    %c7 = arith.constant 7 : index
    %c0_10 = arith.constant 0 : index
    %9 = vector.load %arg1[%c7, %c0_10] : memref<8x256xf32, #tpu.memory_space<vmem>>, vector<1x256xf32>
    %c4_11 = arith.constant 4 : index
    %c0_12 = arith.constant 0 : index
    %c0_13 = arith.constant 0 : index
    %10 = vector.load %arg3[%c4_11, %c0_12, %c0_13] : memref<9x8x8xf32, #tpu.memory_space<vmem>>, vector<1x8x8xf32>
    %11 = vector.shape_cast %10 : vector<1x8x8xf32> to vector<8x8xf32>
    %cst = arith.constant dense<0.000000e+00> : vector<8x256xf32>
    %12 = tpu.matmul %11, %1, %cst {dimension_numbers = #tpu.dot_dimension_numbers<[1], [0], [0], [1], [0, 0, 1, 1], [], []>} : vector<8x8xf32>, vector<8x256xf32>, vector<8x256xf32> -> vector<8x256xf32>
    %c17_i32 = arith.constant 17 : i32
    %13 = tpu.dynamic_rotate %1 by %c17_i32 dim 1 : vector<8x256xf32>, i32 -> vector<8x256xf32>
    %14 = vector.broadcast %2 : vector<1x256xf32> to vector<8x256xf32>
    %15 = arith.mulf %13, %14 : vector<8x256xf32>
    %c0_14 = arith.constant 0 : index
    %c0_15 = arith.constant 0 : index
    %c0_16 = arith.constant 0 : index
    %16 = vector.load %arg3[%c0_14, %c0_15, %c0_16] : memref<9x8x8xf32, #tpu.memory_space<vmem>>, vector<1x8x8xf32>
    %17 = vector.shape_cast %16 : vector<1x8x8xf32> to vector<8x8xf32>
    %cst_17 = arith.constant dense<0.000000e+00> : vector<8x256xf32>
    %18 = tpu.matmul %17, %15, %cst_17 {dimension_numbers = #tpu.dot_dimension_numbers<[1], [0], [0], [1], [0, 0, 1, 1], [], []>} : vector<8x8xf32>, vector<8x256xf32>, vector<8x256xf32> -> vector<8x256xf32>
    %19 = arith.addf %12, %18 : vector<8x256xf32>
    %c16_i32 = arith.constant 16 : i32
    %20 = tpu.dynamic_rotate %1 by %c16_i32 dim 1 : vector<8x256xf32>, i32 -> vector<8x256xf32>
    %21 = vector.broadcast %3 : vector<1x256xf32> to vector<8x256xf32>
    %22 = arith.mulf %20, %21 : vector<8x256xf32>
    %c1_18 = arith.constant 1 : index
    %c0_19 = arith.constant 0 : index
    %c0_20 = arith.constant 0 : index
    %23 = vector.load %arg3[%c1_18, %c0_19, %c0_20] : memref<9x8x8xf32, #tpu.memory_space<vmem>>, vector<1x8x8xf32>
    %24 = vector.shape_cast %23 : vector<1x8x8xf32> to vector<8x8xf32>
    %cst_21 = arith.constant dense<0.000000e+00> : vector<8x256xf32>
    %25 = tpu.matmul %24, %22, %cst_21 {dimension_numbers = #tpu.dot_dimension_numbers<[1], [0], [0], [1], [0, 0, 1, 1], [], []>} : vector<8x8xf32>, vector<8x256xf32>, vector<8x256xf32> -> vector<8x256xf32>
    %26 = arith.addf %19, %25 : vector<8x256xf32>
    %c15_i32 = arith.constant 15 : i32
    %27 = tpu.dynamic_rotate %1 by %c15_i32 dim 1 : vector<8x256xf32>, i32 -> vector<8x256xf32>
    %28 = vector.broadcast %4 : vector<1x256xf32> to vector<8x256xf32>
    %29 = arith.mulf %27, %28 : vector<8x256xf32>
    %c2_22 = arith.constant 2 : index
    %c0_23 = arith.constant 0 : index
    %c0_24 = arith.constant 0 : index
    %30 = vector.load %arg3[%c2_22, %c0_23, %c0_24] : memref<9x8x8xf32, #tpu.memory_space<vmem>>, vector<1x8x8xf32>
    %31 = vector.shape_cast %30 : vector<1x8x8xf32> to vector<8x8xf32>
    %cst_25 = arith.constant dense<0.000000e+00> : vector<8x256xf32>
    %32 = tpu.matmul %31, %29, %cst_25 {dimension_numbers = #tpu.dot_dimension_numbers<[1], [0], [0], [1], [0, 0, 1, 1], [], []>} : vector<8x8xf32>, vector<8x256xf32>, vector<8x256xf32> -> vector<8x256xf32>
    %33 = arith.addf %26, %32 : vector<8x256xf32>
    %c1_i32 = arith.constant 1 : i32
    %34 = tpu.dynamic_rotate %1 by %c1_i32 dim 1 : vector<8x256xf32>, i32 -> vector<8x256xf32>
    %35 = vector.broadcast %5 : vector<1x256xf32> to vector<8x256xf32>
    %36 = arith.mulf %34, %35 : vector<8x256xf32>
    %c3_26 = arith.constant 3 : index
    %c0_27 = arith.constant 0 : index
    %c0_28 = arith.constant 0 : index
    %37 = vector.load %arg3[%c3_26, %c0_27, %c0_28] : memref<9x8x8xf32, #tpu.memory_space<vmem>>, vector<1x8x8xf32>
    %38 = vector.shape_cast %37 : vector<1x8x8xf32> to vector<8x8xf32>
    %cst_29 = arith.constant dense<0.000000e+00> : vector<8x256xf32>
    %39 = tpu.matmul %38, %36, %cst_29 {dimension_numbers = #tpu.dot_dimension_numbers<[1], [0], [0], [1], [0, 0, 1, 1], [], []>} : vector<8x8xf32>, vector<8x256xf32>, vector<8x256xf32> -> vector<8x256xf32>
    %40 = arith.addf %33, %39 : vector<8x256xf32>
    %c255_i32 = arith.constant 255 : i32
    %41 = tpu.dynamic_rotate %1 by %c255_i32 dim 1 : vector<8x256xf32>, i32 -> vector<8x256xf32>
    %42 = vector.broadcast %6 : vector<1x256xf32> to vector<8x256xf32>
    %43 = arith.mulf %41, %42 : vector<8x256xf32>
    %c5_30 = arith.constant 5 : index
    %c0_31 = arith.constant 0 : index
    %c0_32 = arith.constant 0 : index
    %44 = vector.load %arg3[%c5_30, %c0_31, %c0_32] : memref<9x8x8xf32, #tpu.memory_space<vmem>>, vector<1x8x8xf32>
    %45 = vector.shape_cast %44 : vector<1x8x8xf32> to vector<8x8xf32>
    %cst_33 = arith.constant dense<0.000000e+00> : vector<8x256xf32>
    %46 = tpu.matmul %45, %43, %cst_33 {dimension_numbers = #tpu.dot_dimension_numbers<[1], [0], [0], [1], [0, 0, 1, 1], [], []>} : vector<8x8xf32>, vector<8x256xf32>, vector<8x256xf32> -> vector<8x256xf32>
    %47 = arith.addf %40, %46 : vector<8x256xf32>
    %c241_i32 = arith.constant 241 : i32
    %48 = tpu.dynamic_rotate %1 by %c241_i32 dim 1 : vector<8x256xf32>, i32 -> vector<8x256xf32>
    %49 = vector.broadcast %7 : vector<1x256xf32> to vector<8x256xf32>
    %50 = arith.mulf %48, %49 : vector<8x256xf32>
    %c6_34 = arith.constant 6 : index
    %c0_35 = arith.constant 0 : index
    %c0_36 = arith.constant 0 : index
    %51 = vector.load %arg3[%c6_34, %c0_35, %c0_36] : memref<9x8x8xf32, #tpu.memory_space<vmem>>, vector<1x8x8xf32>
    %52 = vector.shape_cast %51 : vector<1x8x8xf32> to vector<8x8xf32>
    %cst_37 = arith.constant dense<0.000000e+00> : vector<8x256xf32>
    %53 = tpu.matmul %52, %50, %cst_37 {dimension_numbers = #tpu.dot_dimension_numbers<[1], [0], [0], [1], [0, 0, 1, 1], [], []>} : vector<8x8xf32>, vector<8x256xf32>, vector<8x256xf32> -> vector<8x256xf32>
    %54 = arith.addf %47, %53 : vector<8x256xf32>
    %c240_i32 = arith.constant 240 : i32
    %55 = tpu.dynamic_rotate %1 by %c240_i32 dim 1 : vector<8x256xf32>, i32 -> vector<8x256xf32>
    %56 = vector.broadcast %8 : vector<1x256xf32> to vector<8x256xf32>
    %57 = arith.mulf %55, %56 : vector<8x256xf32>
    %c7_38 = arith.constant 7 : index
    %c0_39 = arith.constant 0 : index
    %c0_40 = arith.constant 0 : index
    %58 = vector.load %arg3[%c7_38, %c0_39, %c0_40] : memref<9x8x8xf32, #tpu.memory_space<vmem>>, vector<1x8x8xf32>
    %59 = vector.shape_cast %58 : vector<1x8x8xf32> to vector<8x8xf32>
    %cst_41 = arith.constant dense<0.000000e+00> : vector<8x256xf32>
    %60 = tpu.matmul %59, %57, %cst_41 {dimension_numbers = #tpu.dot_dimension_numbers<[1], [0], [0], [1], [0, 0, 1, 1], [], []>} : vector<8x8xf32>, vector<8x256xf32>, vector<8x256xf32> -> vector<8x256xf32>
    %61 = arith.addf %54, %60 : vector<8x256xf32>
    %c239_i32 = arith.constant 239 : i32
    %62 = tpu.dynamic_rotate %1 by %c239_i32 dim 1 : vector<8x256xf32>, i32 -> vector<8x256xf32>
    %63 = vector.broadcast %9 : vector<1x256xf32> to vector<8x256xf32>
    %64 = arith.mulf %62, %63 : vector<8x256xf32>
    %c8 = arith.constant 8 : index
    %c0_42 = arith.constant 0 : index
    %c0_43 = arith.constant 0 : index
    %65 = vector.load %arg3[%c8, %c0_42, %c0_43] : memref<9x8x8xf32, #tpu.memory_space<vmem>>, vector<1x8x8xf32>
    %66 = vector.shape_cast %65 : vector<1x8x8xf32> to vector<8x8xf32>
    %cst_44 = arith.constant dense<0.000000e+00> : vector<8x256xf32>
    %67 = tpu.matmul %66, %64, %cst_44 {dimension_numbers = #tpu.dot_dimension_numbers<[1], [0], [0], [1], [0, 0, 1, 1], [], []>} : vector<8x8xf32>, vector<8x256xf32>, vector<8x256xf32> -> vector<8x256xf32>
    %68 = arith.addf %61, %67 : vector<8x256xf32>
    %cst_45 = arith.constant dense<0.000000e+00> : vector<8xf32>
    %69 = vector.multi_reduction <add>, %68, %cst_45 [1] : vector<8x256xf32> to vector<8xf32>
    %70 = vector.shape_cast %69 : vector<8xf32> to vector<8x1xf32>
    %cst_46 = arith.constant 2.560000e+02 : f32
    %71 = vector.broadcast %cst_46 : f32 to vector<8x1xf32>
    %72 = arith.divf %70, %71 : vector<8x1xf32>
    %73 = vector.broadcast %72 : vector<8x1xf32> to vector<8x256xf32>
    %74 = arith.subf %68, %73 : vector<8x256xf32>
    %75 = arith.mulf %74, %74 : vector<8x256xf32>
    %cst_47 = arith.constant dense<0.000000e+00> : vector<8xf32>
    %76 = vector.multi_reduction <add>, %75, %cst_47 [1] : vector<8x256xf32> to vector<8xf32>
    %77 = vector.shape_cast %76 : vector<8xf32> to vector<8x1xf32>
    %cst_48 = arith.constant 2.560000e+02 : f32
    %78 = vector.broadcast %cst_48 : f32 to vector<8x1xf32>
    %79 = arith.divf %77, %78 : vector<8x1xf32>
    %80 = vector.broadcast %72 : vector<8x1xf32> to vector<8x256xf32>
    %81 = arith.subf %68, %80 : vector<8x256xf32>
    %cst_49 = arith.constant 9.99999974E-6 : f32
    %82 = vector.broadcast %cst_49 : f32 to vector<8x1xf32>
    %83 = arith.addf %79, %82 : vector<8x1xf32>
    %84 = math.rsqrt %83 : vector<8x1xf32>
    %85 = vector.broadcast %84 : vector<8x1xf32> to vector<8x256xf32>
    %86 = arith.mulf %81, %85 : vector<8x256xf32>
    %cst_50 = arith.constant 0.000000e+00 : f32
    %87 = vector.broadcast %cst_50 : f32 to vector<8x256xf32>
    %88 = arith.maximumf %86, %87 : vector<8x256xf32>
    %c4_51 = arith.constant 4 : index
    %c0_52 = arith.constant 0 : index
    %c0_53 = arith.constant 0 : index
    %89 = vector.load %arg4[%c4_51, %c0_52, %c0_53] : memref<9x8x8xf32, #tpu.memory_space<vmem>>, vector<1x8x8xf32>
    %90 = vector.shape_cast %89 : vector<1x8x8xf32> to vector<8x8xf32>
    %cst_54 = arith.constant dense<0.000000e+00> : vector<8x256xf32>
    %91 = tpu.matmul %90, %88, %cst_54 {dimension_numbers = #tpu.dot_dimension_numbers<[1], [0], [0], [1], [0, 0, 1, 1], [], []>} : vector<8x8xf32>, vector<8x256xf32>, vector<8x256xf32> -> vector<8x256xf32>
    %c17_i32_55 = arith.constant 17 : i32
    %92 = tpu.dynamic_rotate %88 by %c17_i32_55 dim 1 : vector<8x256xf32>, i32 -> vector<8x256xf32>
    %93 = vector.broadcast %2 : vector<1x256xf32> to vector<8x256xf32>
    %94 = arith.mulf %92, %93 : vector<8x256xf32>
    %c0_56 = arith.constant 0 : index
    %c0_57 = arith.constant 0 : index
    %c0_58 = arith.constant 0 : index
    %95 = vector.load %arg4[%c0_56, %c0_57, %c0_58] : memref<9x8x8xf32, #tpu.memory_space<vmem>>, vector<1x8x8xf32>
    %96 = vector.shape_cast %95 : vector<1x8x8xf32> to vector<8x8xf32>
    %cst_59 = arith.constant dense<0.000000e+00> : vector<8x256xf32>
    %97 = tpu.matmul %96, %94, %cst_59 {dimension_numbers = #tpu.dot_dimension_numbers<[1], [0], [0], [1], [0, 0, 1, 1], [], []>} : vector<8x8xf32>, vector<8x256xf32>, vector<8x256xf32> -> vector<8x256xf32>
    %98 = arith.addf %91, %97 : vector<8x256xf32>
    %c16_i32_60 = arith.constant 16 : i32
    %99 = tpu.dynamic_rotate %88 by %c16_i32_60 dim 1 : vector<8x256xf32>, i32 -> vector<8x256xf32>
    %100 = vector.broadcast %3 : vector<1x256xf32> to vector<8x256xf32>
    %101 = arith.mulf %99, %100 : vector<8x256xf32>
    %c1_61 = arith.constant 1 : index
    %c0_62 = arith.constant 0 : index
    %c0_63 = arith.constant 0 : index
    %102 = vector.load %arg4[%c1_61, %c0_62, %c0_63] : memref<9x8x8xf32, #tpu.memory_space<vmem>>, vector<1x8x8xf32>
    %103 = vector.shape_cast %102 : vector<1x8x8xf32> to vector<8x8xf32>
    %cst_64 = arith.constant dense<0.000000e+00> : vector<8x256xf32>
    %104 = tpu.matmul %103, %101, %cst_64 {dimension_numbers = #tpu.dot_dimension_numbers<[1], [0], [0], [1], [0, 0, 1, 1], [], []>} : vector<8x8xf32>, vector<8x256xf32>, vector<8x256xf32> -> vector<8x256xf32>
    %105 = arith.addf %98, %104 : vector<8x256xf32>
    %c15_i32_65 = arith.constant 15 : i32
    %106 = tpu.dynamic_rotate %88 by %c15_i32_65 dim 1 : vector<8x256xf32>, i32 -> vector<8x256xf32>
    %107 = vector.broadcast %4 : vector<1x256xf32> to vector<8x256xf32>
    %108 = arith.mulf %106, %107 : vector<8x256xf32>
    %c2_66 = arith.constant 2 : index
    %c0_67 = arith.constant 0 : index
    %c0_68 = arith.constant 0 : index
    %109 = vector.load %arg4[%c2_66, %c0_67, %c0_68] : memref<9x8x8xf32, #tpu.memory_space<vmem>>, vector<1x8x8xf32>
    %110 = vector.shape_cast %109 : vector<1x8x8xf32> to vector<8x8xf32>
    %cst_69 = arith.constant dense<0.000000e+00> : vector<8x256xf32>
    %111 = tpu.matmul %110, %108, %cst_69 {dimension_numbers = #tpu.dot_dimension_numbers<[1], [0], [0], [1], [0, 0, 1, 1], [], []>} : vector<8x8xf32>, vector<8x256xf32>, vector<8x256xf32> -> vector<8x256xf32>
    %112 = arith.addf %105, %111 : vector<8x256xf32>
    %c1_i32_70 = arith.constant 1 : i32
    %113 = tpu.dynamic_rotate %88 by %c1_i32_70 dim 1 : vector<8x256xf32>, i32 -> vector<8x256xf32>
    %114 = vector.broadcast %5 : vector<1x256xf32> to vector<8x256xf32>
    %115 = arith.mulf %113, %114 : vector<8x256xf32>
    %c3_71 = arith.constant 3 : index
    %c0_72 = arith.constant 0 : index
    %c0_73 = arith.constant 0 : index
    %116 = vector.load %arg4[%c3_71, %c0_72, %c0_73] : memref<9x8x8xf32, #tpu.memory_space<vmem>>, vector<1x8x8xf32>
    %117 = vector.shape_cast %116 : vector<1x8x8xf32> to vector<8x8xf32>
    %cst_74 = arith.constant dense<0.000000e+00> : vector<8x256xf32>
    %118 = tpu.matmul %117, %115, %cst_74 {dimension_numbers = #tpu.dot_dimension_numbers<[1], [0], [0], [1], [0, 0, 1, 1], [], []>} : vector<8x8xf32>, vector<8x256xf32>, vector<8x256xf32> -> vector<8x256xf32>
    %119 = arith.addf %112, %118 : vector<8x256xf32>
    %c255_i32_75 = arith.constant 255 : i32
    %120 = tpu.dynamic_rotate %88 by %c255_i32_75 dim 1 : vector<8x256xf32>, i32 -> vector<8x256xf32>
    %121 = vector.broadcast %6 : vector<1x256xf32> to vector<8x256xf32>
    %122 = arith.mulf %120, %121 : vector<8x256xf32>
    %c5_76 = arith.constant 5 : index
    %c0_77 = arith.constant 0 : index
    %c0_78 = arith.constant 0 : index
    %123 = vector.load %arg4[%c5_76, %c0_77, %c0_78] : memref<9x8x8xf32, #tpu.memory_space<vmem>>, vector<1x8x8xf32>
    %124 = vector.shape_cast %123 : vector<1x8x8xf32> to vector<8x8xf32>
    %cst_79 = arith.constant dense<0.000000e+00> : vector<8x256xf32>
    %125 = tpu.matmul %124, %122, %cst_79 {dimension_numbers = #tpu.dot_dimension_numbers<[1], [0], [0], [1], [0, 0, 1, 1], [], []>} : vector<8x8xf32>, vector<8x256xf32>, vector<8x256xf32> -> vector<8x256xf32>
    %126 = arith.addf %119, %125 : vector<8x256xf32>
    %c241_i32_80 = arith.constant 241 : i32
    %127 = tpu.dynamic_rotate %88 by %c241_i32_80 dim 1 : vector<8x256xf32>, i32 -> vector<8x256xf32>
    %128 = vector.broadcast %7 : vector<1x256xf32> to vector<8x256xf32>
    %129 = arith.mulf %127, %128 : vector<8x256xf32>
    %c6_81 = arith.constant 6 : index
    %c0_82 = arith.constant 0 : index
    %c0_83 = arith.constant 0 : index
    %130 = vector.load %arg4[%c6_81, %c0_82, %c0_83] : memref<9x8x8xf32, #tpu.memory_space<vmem>>, vector<1x8x8xf32>
    %131 = vector.shape_cast %130 : vector<1x8x8xf32> to vector<8x8xf32>
    %cst_84 = arith.constant dense<0.000000e+00> : vector<8x256xf32>
    %132 = tpu.matmul %131, %129, %cst_84 {dimension_numbers = #tpu.dot_dimension_numbers<[1], [0], [0], [1], [0, 0, 1, 1], [], []>} : vector<8x8xf32>, vector<8x256xf32>, vector<8x256xf32> -> vector<8x256xf32>
    %133 = arith.addf %126, %132 : vector<8x256xf32>
    %c240_i32_85 = arith.constant 240 : i32
    %134 = tpu.dynamic_rotate %88 by %c240_i32_85 dim 1 : vector<8x256xf32>, i32 -> vector<8x256xf32>
    %135 = vector.broadcast %8 : vector<1x256xf32> to vector<8x256xf32>
    %136 = arith.mulf %134, %135 : vector<8x256xf32>
    %c7_86 = arith.constant 7 : index
    %c0_87 = arith.constant 0 : index
    %c0_88 = arith.constant 0 : index
    %137 = vector.load %arg4[%c7_86, %c0_87, %c0_88] : memref<9x8x8xf32, #tpu.memory_space<vmem>>, vector<1x8x8xf32>
    %138 = vector.shape_cast %137 : vector<1x8x8xf32> to vector<8x8xf32>
    %cst_89 = arith.constant dense<0.000000e+00> : vector<8x256xf32>
    %139 = tpu.matmul %138, %136, %cst_89 {dimension_numbers = #tpu.dot_dimension_numbers<[1], [0], [0], [1], [0, 0, 1, 1], [], []>} : vector<8x8xf32>, vector<8x256xf32>, vector<8x256xf32> -> vector<8x256xf32>
    %140 = arith.addf %133, %139 : vector<8x256xf32>
    %c239_i32_90 = arith.constant 239 : i32
    %141 = tpu.dynamic_rotate %88 by %c239_i32_90 dim 1 : vector<8x256xf32>, i32 -> vector<8x256xf32>
    %142 = vector.broadcast %9 : vector<1x256xf32> to vector<8x256xf32>
    %143 = arith.mulf %141, %142 : vector<8x256xf32>
    %c8_91 = arith.constant 8 : index
    %c0_92 = arith.constant 0 : index
    %c0_93 = arith.constant 0 : index
    %144 = vector.load %arg4[%c8_91, %c0_92, %c0_93] : memref<9x8x8xf32, #tpu.memory_space<vmem>>, vector<1x8x8xf32>
    %145 = vector.shape_cast %144 : vector<1x8x8xf32> to vector<8x8xf32>
    %cst_94 = arith.constant dense<0.000000e+00> : vector<8x256xf32>
    %146 = tpu.matmul %145, %143, %cst_94 {dimension_numbers = #tpu.dot_dimension_numbers<[1], [0], [0], [1], [0, 0, 1, 1], [], []>} : vector<8x8xf32>, vector<8x256xf32>, vector<8x256xf32> -> vector<8x256xf32>
    %147 = arith.addf %140, %146 : vector<8x256xf32>
    %cst_95 = arith.constant dense<0.000000e+00> : vector<8xf32>
    %148 = vector.multi_reduction <add>, %147, %cst_95 [1] : vector<8x256xf32> to vector<8xf32>
    %149 = vector.shape_cast %148 : vector<8xf32> to vector<8x1xf32>
    %cst_96 = arith.constant 2.560000e+02 : f32
    %150 = vector.broadcast %cst_96 : f32 to vector<8x1xf32>
    %151 = arith.divf %149, %150 : vector<8x1xf32>
    %152 = vector.broadcast %151 : vector<8x1xf32> to vector<8x256xf32>
    %153 = arith.subf %147, %152 : vector<8x256xf32>
    %154 = arith.mulf %153, %153 : vector<8x256xf32>
    %cst_97 = arith.constant dense<0.000000e+00> : vector<8xf32>
    %155 = vector.multi_reduction <add>, %154, %cst_97 [1] : vector<8x256xf32> to vector<8xf32>
    %156 = vector.shape_cast %155 : vector<8xf32> to vector<8x1xf32>
    %cst_98 = arith.constant 2.560000e+02 : f32
    %157 = vector.broadcast %cst_98 : f32 to vector<8x1xf32>
    %158 = arith.divf %156, %157 : vector<8x1xf32>
    %159 = vector.broadcast %151 : vector<8x1xf32> to vector<8x256xf32>
    %160 = arith.subf %147, %159 : vector<8x256xf32>
    %cst_99 = arith.constant 9.99999974E-6 : f32
    %161 = vector.broadcast %cst_99 : f32 to vector<8x1xf32>
    %162 = arith.addf %158, %161 : vector<8x1xf32>
    %163 = math.rsqrt %162 : vector<8x1xf32>
    %164 = vector.broadcast %163 : vector<8x1xf32> to vector<8x256xf32>
    %165 = arith.mulf %160, %164 : vector<8x256xf32>
    %166 = arith.addf %1, %165 : vector<8x256xf32>
    %c0_100 = arith.constant 0 : index
    %c0_101 = arith.constant 0 : index
    %c0_102 = arith.constant 0 : index
    %167 = vector.load %arg5[%c0_100, %c0_101, %c0_102] : memref<1x8x256xf32, #tpu.memory_space<vmem>>, vector<1x8x256xf32>
    %168 = vector.shape_cast %167 : vector<1x8x256xf32> to vector<8x256xf32>
    %169 = vector.shape_cast %166 : vector<8x256xf32> to vector<1x8x256xf32>
    tpu.vector_store %arg5[%c0_100, %c0_101, %c0_102], %169 {strides = array<i32>} : memref<1x8x256xf32, #tpu.memory_space<vmem>>, vector<1x8x256xf32>,
    return
  }
  func.func @transform_0(%arg0: i32) -> (i32, i32) {
    %c0_i32 = arith.constant 0 : i32
    %c0_i32_0 = arith.constant 0 : i32
    %c0_i32_1 = arith.constant 0 : i32
    return %c0_i32, %c0_i32_0 : i32, i32
  }
  func.func @transform_1(%arg0: i32) -> (i32, i32, i32) {
    %c0_i32 = arith.constant 0 : i32
    %c0_i32_0 = arith.constant 0 : i32
    %c0_i32_1 = arith.constant 0 : i32
    return %arg0, %c0_i32, %c0_i32_0 : i32, i32, i32
  }
  func.func @transform_2(%arg0: i32) -> (i32, i32, i32) {
    %c0_i32 = arith.constant 0 : i32
    %c0_i32_0 = arith.constant 0 : i32
    %c0_i32_1 = arith.constant 0 : i32
    %c0_i32_2 = arith.constant 0 : i32
    return %c0_i32, %c0_i32_0, %c0_i32_1 : i32, i32, i32
  }
  func.func @transform_3(%arg0: i32) -> (i32, i32, i32) {
    %c0_i32 = arith.constant 0 : i32
    %c0_i32_0 = arith.constant 0 : i32
    %c0_i32_1 = arith.constant 0 : i32
    %c0_i32_2 = arith.constant 0 : i32
    return %c0_i32, %c0_i32_0, %c0_i32_1 : i32, i32, i32
  }
  func.func @transform_4(%arg0: i32) -> (i32, i32, i32) {
    %c0_i32 = arith.constant 0 : i32
    %c0_i32_0 = arith.constant 0 : i32
    %c0_i32_1 = arith.constant 0 : i32
    return %arg0, %c0_i32, %c0_i32_0 : i32, i32, i32
  }
}

</mosaic_0001>

<llo_original>
// kernel: _residual_block_impl.1
$region0: #{_residual_block_impl.1}
  #allocation0 [shape = 'u32[]', space=smem, size = 0x4, offset = 0x4, fixed_abs, tag = 'smem constant byte address 0x4 - core index']
  #allocation1 [shape = 'u32[144,128]{1,0:T(1,128)}', space=vmem, size = 0x12000, scoped, tag = 'internal scratch']
  %s0 = inlined_call_operand.vmem [shape: f32[8,256], index: 0, kind: input, shape index: {}]
  %s1 = inlined_call_operand.vmem [shape: f32[1,8,256], index: 1, kind: input, shape index: {}]
  %s2 = inlined_call_operand.vmem [shape: f32[9,8,8], index: 2, kind: input, shape index: {}]
  %s3 = inlined_call_operand.vmem [shape: f32[9,8,8], index: 3, kind: input, shape index: {}]
  %s4 = inlined_call_operand.vmem [shape: f32[1,8,256], index: 4, kind: output, shape index: {}]
  %s5 = sld [smem:[#allocation0]]
  $region26: #{_residual_block_impl.1} parent=0
    _
  %s7 = ssub.s32 1, %s5
  %s8 = scalar_select 0, %s7, %s5
  // Predicated region
  $region2: #{_residual_block_impl.1} parent=0 // pred_check
    _
  $region3: #{_residual_block_impl.1} parent=0 // pred_check_branch
    %10 = sbr.rel (0) target = $region5
  $region4: #{_residual_block_impl.1} parent=0 // pred_region
    _
  $region5: #{_residual_block_impl.1} parent=0 // pred_fallthru
    _
  // Predicated region
  $region6: #{_residual_block_impl.1} parent=0 // pred_check
    _
  $region7: #{_residual_block_impl.1} parent=0 // pred_check_branch
    %12 = sbr.rel (0) target = $region9
  $region8: #{_residual_block_impl.1} parent=0 // pred_region
    _
  $region9: #{_residual_block_impl.1} parent=0 // pred_fallthru
    _
  // Predicated region
  $region10: #{_residual_block_impl.1} parent=0 // pred_check
    _
  $region11: #{_residual_block_impl.1} parent=0 // pred_check_branch
    %14 = sbr.rel (0) target = $region13
  $region12: #{_residual_block_impl.1} parent=0 // pred_region
    _
  $region13: #{_residual_block_impl.1} parent=0 // pred_fallthru
    _
  // Predicated region
  $region14: #{_residual_block_impl.1} parent=0 // pred_check
    _
  $region15: #{_residual_block_impl.1} parent=0 // pred_check_branch
    %16 = sbr.rel (0) target = $region17
  $region16: #{_residual_block_impl.1} parent=0 // pred_region
    _
  $region17: #{_residual_block_impl.1} parent=0 // pred_fallthru
    _
  %v17 = vld [vmem:[%s1] sm:$0xff]
  %v18 = vld [vmem:[%s1 + $0x8] sm:$0xff]
  %v19 = vld [vmem:[%s0] ss:$8 sm:$0x3]
  %s20 = scalar_lea.vmem %s0, 1
  %v21 = vld [vmem:[%s20] ss:$8 sm:$0x3]
  %s22 = scalar_lea.vmem %s0, 2
  %v23 = vld [vmem:[%s22] ss:$8 sm:$0x3]
  %s24 = scalar_lea.vmem %s0, 3
  %v25 = vld [vmem:[%s24] ss:$8 sm:$0x3]
  %s26 = scalar_lea.vmem %s0, 4
  %v27 = vld [vmem:[%s26] ss:$8 sm:$0x3]
  %s28 = scalar_lea.vmem %s0, 5
  %v29 = vld [vmem:[%s28] ss:$8 sm:$0x3]
  %s30 = scalar_lea.vmem %s0, 6
  %v31 = vld [vmem:[%s30] ss:$8 sm:$0x3]
  %s32 = scalar_lea.vmem %s0, 7
  %v33 = vld [vmem:[%s32] ss:$8 sm:$0x3]
  %s34 = scalar_lea.vmem %s2, 32
  %v35 = vld [vmem:[%s34] sm:$0xff]
  %36 = vrot.lane.b32.xlu0 %v17, 17
  %v37 = vpop.permute.xlu0 %36
  %38 = vrot.lane.b32.xlu0 %v18, 17
  %v39 = vpop.permute.xlu0 %38
  %v40 = vlaneseq
  %v41 = vand.u32 %v40, 127
  %vm42 = vcmp.lt.s32.totalorder %v41, 17
  %v43 = vsel %vm42, %v37, %v39
  %v44 = vsel %vm42, %v39, %v37
  %v46 = vlaneseq
  %v47 = vshrl.u32 %v46, 7
  %v48 = vsub.s32 0, %v47
  %v49 = vrot.slane %v19, %v48
  %v50 = vlaneseq
  %v51 = vshrl.u32 %v50, 7
  %v52 = vsub.s32 1, %v51
  %v53 = vrot.slane %v19, %v52
  %v56 = vmul.f32 %v44, %v49
  %v57 = vmul.f32 %v43, %v53
  %v58 = vld [vmem:[%s2] sm:$0xff]
  %vm59 = vcmask 64512
  %v61 = vsel %vm59, %v58, 0
  %63 = vmatprep.subr.mxu0 %v57
  %64 = vmatpush1.msra.mxu0 %v56
  %65 = vmatprep.subr.mxu0 0.0
  %66 = vmatpush1.msra.mxu0 0.0
  %67 = vmatprep.subr.mxu0 0.0
  %68 = vmatpush1.msra.mxu0 0.0
  %69 = vmatprep.subr.mxu0 0.0
  %70 = vmatpush1.msra.mxu0 0.0
  %71 = vmatprep.subr.mxu0 0.0
  %72 = vmatpush1.msra.mxu0 0.0
  %73 = vmatprep.subr.mxu0 0.0
  %74 = vmatpush1.msra.mxu0 0.0
  %75 = vmatprep.subr.mxu0 0.0
  %76 = vmatpush1.msra.mxu0 0.0
  %77 = vmatprep.subr.mxu0 0.0
  %78 = vmatpush1.msra.mxu0 0.0
  %79 = vmatprep.subr.mxu0 0.0
  %80 = vmatpush1.msra.mxu0 0.0
  %81 = vmatprep.subr.mxu0 0.0
  %82 = vmatpush1.msra.mxu0 0.0
  %83 = vmatprep.subr.mxu0 0.0
  %84 = vmatpush1.msra.mxu0 0.0
  %85 = vmatprep.subr.mxu0 0.0
  %86 = vmatpush1.msra.mxu0 0.0
  %87 = vmatprep.subr.mxu0 0.0
  %88 = vmatpush1.msra.mxu0 0.0
  %89 = vmatprep.subr.mxu0 0.0
  %90 = vmatpush1.msra.mxu0 0.0
  %91 = vmatprep.subr.mxu0 0.0
  %92 = vmatpush1.msra.mxu0 0.0
  %93 = vmatprep.subr.mxu0 0.0
  %94 = vmatpush1.msra.mxu0 0.0
  %95 = vmatprep.subr.mxu0 0.0
  %96 = vmatpush1.msra.mxu0 0.0
  %97 = vmatprep.subr.mxu0 0.0
  %98 = vmatpush1.msra.mxu0 0.0
  %99 = vmatprep.subr.mxu0 0.0
  %100 = vmatpush1.msra.mxu0 0.0
  %101 = vmatprep.subr.mxu0 0.0
  %102 = vmatpush1.msra.mxu0 0.0
  %103 = vmatprep.subr.mxu0 0.0
  %104 = vmatpush1.msra.mxu0 0.0
  %105 = vmatprep.subr.mxu0 0.0
  %106 = vmatpush1.msra.mxu0 0.0
  %107 = vmatprep.subr.mxu0 0.0
  %108 = vmatpush1.msra.mxu0 0.0
  %109 = vmatprep.subr.mxu0 0.0
  %110 = vmatpush1.msra.mxu0 0.0
  %111 = vmatprep.subr.mxu0 0.0
  %112 = vmatpush1.msra.mxu0 0.0
  %113 = vmatprep.subr.mxu0 0.0
  %114 = vmatpush1.msra.mxu0 0.0
  %115 = vmatprep.subr.mxu0 0.0
  %116 = vmatpush1.msra.mxu0 0.0
  %117 = vmatprep.subr.mxu0 0.0
  %118 = vmatpush1.msra.mxu0 0.0
  %119 = vmatprep.subr.mxu0 0.0
  %120 = vmatpush1.msra.mxu0 0.0
  %121 = vmatprep.subr.mxu0 0.0
  %122 = vmatpush1.msra.mxu0 0.0
  %123 = vmatprep.subr.mxu0 0.0
  %124 = vmatpush1.msra.mxu0 0.0
  %125 = vmatprep.subr.mxu0 0.0
  %126 = vmatpush1.msra.mxu0 0.0
  %127 = vmatprep.mubr.f32.mxu0 0.0
  %128 = vmatmul.mubr.f32.gmra.mrb[0].mxu0 %v61
  %v129 = vpop.f32.mrb[0].mxu0
  %v130 = vadd.f32 0.0, %v129
  %v131 = vpop.f32.mrb[0].mxu0
  %v132 = vadd.f32 0.0, %v131
  %133 = vdwg.mxu0
  %v135 = vsel %vm59, %v35, 0
  %137 = vmatprep.subr.mxu0 %v18
  %138 = vmatpush1.msra.mxu0 %v17
  %139 = vmatprep.subr.mxu0 0.0
  %140 = vmatpush1.msra.mxu0 0.0
  %141 = vmatprep.subr.mxu0 0.0
  %142 = vmatpush1.msra.mxu0 0.0
  %143 = vmatprep.subr.mxu0 0.0
  %144 = vmatpush1.msra.mxu0 0.0
  %145 = vmatprep.subr.mxu0 0.0
  %146 = vmatpush1.msra.mxu0 0.0
  %147 = vmatprep.subr.mxu0 0.0
  %148 = vmatpush1.msra.mxu0 0.0
  %149 = vmatprep.subr.mxu0 0.0
  %150 = vmatpush1.msra.mxu0 0.0
  %151 = vmatprep.subr.mxu0 0.0
  %152 = vmatpush1.msra.mxu0 0.0
  %153 = vmatprep.subr.mxu0 0.0
  %154 = vmatpush1.msra.mxu0 0.0
  %155 = vmatprep.subr.mxu0 0.0
  %156 = vmatpush1.msra.mxu0 0.0
  %157 = vmatprep.subr.mxu0 0.0
  %158 = vmatpush1.msra.mxu0 0.0
  %159 = vmatprep.subr.mxu0 0.0
  %160 = vmatpush1.msra.mxu0 0.0
  %161 = vmatprep.subr.mxu0 0.0
  %162 = vmatpush1.msra.mxu0 0.0
  %163 = vmatprep.subr.mxu0 0.0
  %164 = vmatpush1.msra.mxu0 0.0
  %165 = vmatprep.subr.mxu0 0.0
  %166 = vmatpush1.msra.mxu0 0.0
  %167 = vmatprep.subr.mxu0 0.0
  %168 = vmatpush1.msra.mxu0 0.0
  %169 = vmatprep.subr.mxu0 0.0
  %170 = vmatpush1.msra.mxu0 0.0
  %171 = vmatprep.subr.mxu0 0.0
  %172 = vmatpush1.msra.mxu0 0.0
  %173 = vmatprep.subr.mxu0 0.0
  %174 = vmatpush1.msra.mxu0 0.0
  %175 = vmatprep.subr.mxu0 0.0
  %176 = vmatpush1.msra.mxu0 0.0
  %177 = vmatprep.subr.mxu0 0.0
  %178 = vmatpush1.msra.mxu0 0.0
  %179 = vmatprep.subr.mxu0 0.0
  %180 = vmatpush1.msra.mxu0 0.0
  %181 = vmatprep.subr.mxu0 0.0
  %182 = vmatpush1.msra.mxu0 0.0
  %183 = vmatprep.subr.mxu0 0.0
  %184 = vmatpush1.msra.mxu0 0.0
  %185 = vmatprep.subr.mxu0 0.0
  %186 = vmatpush1.msra.mxu0 0.0
  %187 = vmatprep.subr.mxu0 0.0
  %188 = vmatpush1.msra.mxu0 0.0
  %189 = vmatprep.subr.mxu0 0.0
  %190 = vmatpush1.msra.mxu0 0.0
  %191 = vmatprep.subr.mxu0 0.0
  %192 = vmatpush1.msra.mxu0 0.0
  %193 = vmatprep.subr.mxu0 0.0
  %194 = vmatpush1.msra.mxu0 0.0
  %195 = vmatprep.subr.mxu0 0.0
  %196 = vmatpush1.msra.mxu0 0.0
  %197 = vmatprep.subr.mxu0 0.0
  %198 = vmatpush1.msra.mxu0 0.0
  %199 = vmatprep.subr.mxu0 0.0
  %200 = vmatpush1.msra.mxu0 0.0
  %201 = vmatprep.mubr.f32.mxu0 0.0
  %202 = vmatmul.mubr.f32.gmra.mrb[0].mxu0 %v135
  %v203 = vpop.f32.mrb[0].mxu0
  %v204 = vadd.f32 %v130, %v203
  %v205 = vpop.f32.mrb[0].mxu0
  %v206 = vadd.f32 %v132, %v205
  %207 = vdwg.mxu0
  %208 = vrot.lane.b32.xlu0 %v17, 16
  %v209 = vpop.permute.xlu0 %208
  %210 = vrot.lane.b32.xlu0 %v18, 16
  %v211 = vpop.permute.xlu0 %210
  %vm212 = vcmp.lt.s32.totalorder %v41, 16
  %v213 = vsel %vm212, %v209, %v211
  %v214 = vsel %vm212, %v211, %v209
  %v216 = vlaneseq
  %v217 = vshrl.u32 %v216, 7
  %v218 = vsub.s32 0, %v217
  %v219 = vrot.slane %v21, %v218
  %v220 = vlaneseq
  %v221 = vshrl.u32 %v220, 7
  %v222 = vsub.s32 1, %v221
  %v223 = vrot.slane %v21, %v222
  %v226 = vmul.f32 %v214, %v219
  %v227 = vmul.f32 %v213, %v223
  %s228 = scalar_lea.vmem %s2, 8
  %v229 = vld [vmem:[%s228] sm:$0xff]
  %v231 = vsel %vm59, %v229, 0
  %233 = vmatprep.subr.mxu0 %v227
  %234 = vmatpush1.msra.mxu0 %v226
  %235 = vmatprep.subr.mxu0 0.0
  %236 = vmatpush1.msra.mxu0 0.0
  %237 = vmatprep.subr.mxu0 0.0
  %238 = vmatpush1.msra.mxu0 0.0
  %239 = vmatprep.subr.mxu0 0.0
  %240 = vmatpush1.msra.mxu0 0.0
  %241 = vmatprep.subr.mxu0 0.0
  %242 = vmatpush1.msra.mxu0 0.0
  %243 = vmatprep.subr.mxu0 0.0
  %244 = vmatpush1.msra.mxu0 0.0
  %245 = vmatprep.subr.mxu0 0.0
  %246 = vmatpush1.msra.mxu0 0.0
  %247 = vmatprep.subr.mxu0 0.0
  %248 = vmatpush1.msra.mxu0 0.0
  %249 = vmatprep.subr.mxu0 0.0
  %250 = vmatpush1.msra.mxu0 0.0
  %251 = vmatprep.subr.mxu0 0.0
  %252 = vmatpush1.msra.mxu0 0.0
  %253 = vmatprep.subr.mxu0 0.0
  %254 = vmatpush1.msra.mxu0 0.0
  %255 = vmatprep.subr.mxu0 0.0
  %256 = vmatpush1.msra.mxu0 0.0
  %257 = vmatprep.subr.mxu0 0.0
  %258 = vmatpush1.msra.mxu0 0.0
  %259 = vmatprep.subr.mxu0 0.0
  %260 = vmatpush1.msra.mxu0 0.0
  %261 = vmatprep.subr.mxu0 0.0
  %262 = vmatpush1.msra.mxu0 0.0
  %263 = vmatprep.subr.mxu0 0.0
  %264 = vmatpush1.msra.mxu0 0.0
  %265 = vmatprep.subr.mxu0 0.0
  %266 = vmatpush1.msra.mxu0 0.0
  %267 = vmatprep.subr.mxu0 0.0
  %268 = vmatpush1.msra.mxu0 0.0
  %269 = vmatprep.subr.mxu0 0.0
  %270 = vmatpush1.msra.mxu0 0.0
  %271 = vmatprep.subr.mxu0 0.0
  %272 = vmatpush1.msra.mxu0 0.0
  %273 = vmatprep.subr.mxu0 0.0
  %274 = vmatpush1.msra.mxu0 0.0
  %275 = vmatprep.subr.mxu0 0.0
  %276 = vmatpush1.msra.mxu0 0.0
  %277 = vmatprep.subr.mxu0 0.0
  %278 = vmatpush1.msra.mxu0 0.0
  %279 = vmatprep.subr.mxu0 0.0
  %280 = vmatpush1.msra.mxu0 0.0
  %281 = vmatprep.subr.mxu0 0.0
  %282 = vmatpush1.msra.mxu0 0.0
  %283 = vmatprep.subr.mxu0 0.0
  %284 = vmatpush1.msra.mxu0 0.0
  %285 = vmatprep.subr.mxu0 0.0
  %286 = vmatpush1.msra.mxu0 0.0
  %287 = vmatprep.subr.mxu0 0.0
  %288 = vmatpush1.msra.mxu0 0.0
  %289 = vmatprep.subr.mxu0 0.0
  %290 = vmatpush1.msra.mxu0 0.0
  %291 = vmatprep.subr.mxu0 0.0
  %292 = vmatpush1.msra.mxu0 0.0
  %293 = vmatprep.subr.mxu0 0.0
  %294 = vmatpush1.msra.mxu0 0.0
  %295 = vmatprep.subr.mxu0 0.0
  %296 = vmatpush1.msra.mxu0 0.0
  %297 = vmatprep.mubr.f32.mxu0 0.0
  %298 = vmatmul.mubr.f32.gmra.mrb[0].mxu0 %v231
  %v299 = vpop.f32.mrb[0].mxu0
  %v300 = vadd.f32 0.0, %v299
  %v301 = vpop.f32.mrb[0].mxu0
  %v302 = vadd.f32 0.0, %v301
  %303 = vdwg.mxu0
  %v304 = vadd.f32 %v204, %v300
  %v305 = vadd.f32 %v206, %v302
  %306 = vrot.lane.b32.xlu0 %v17, 15
  %v307 = vpop.permute.xlu0 %306
  %308 = vrot.lane.b32.xlu0 %v18, 15
  %v309 = vpop.permute.xlu0 %308
  %vm310 = vcmp.lt.s32.totalorder %v41, 15
  %v311 = vsel %vm310, %v307, %v309
  %v312 = vsel %vm310, %v309, %v307
  %v314 = vlaneseq
  %v315 = vshrl.u32 %v314, 7
  %v316 = vsub.s32 0, %v315
  %v317 = vrot.slane %v23, %v316
  %v318 = vlaneseq
  %v319 = vshrl.u32 %v318, 7
  %v320 = vsub.s32 1, %v319
  %v321 = vrot.slane %v23, %v320
  %v324 = vmul.f32 %v312, %v317
  %v325 = vmul.f32 %v311, %v321
  %s326 = scalar_lea.vmem %s2, 16
  %v327 = vld [vmem:[%s326] sm:$0xff]
  %v329 = vsel %vm59, %v327, 0
  %331 = vmatprep.subr.mxu0 %v325
  %332 = vmatpush1.msra.mxu0 %v324
  %333 = vmatprep.subr.mxu0 0.0
  %334 = vmatpush1.msra.mxu0 0.0
  %335 = vmatprep.subr.mxu0 0.0
  %336 = vmatpush1.msra.mxu0 0.0
  %337 = vmatprep.subr.mxu0 0.0
  %338 = vmatpush1.msra.mxu0 0.0
  %339 = vmatprep.subr.mxu0 0.0
  %340 = vmatpush1.msra.mxu0 0.0
  %341 = vmatprep.subr.mxu0 0.0
  %342 = vmatpush1.msra.mxu0 0.0
  %343 = vmatprep.subr.mxu0 0.0
  %344 = vmatpush1.msra.mxu0 0.0
  %345 = vmatprep.subr.mxu0 0.0
  %346 = vmatpush1.msra.mxu0 0.0
  %347 = vmatprep.subr.mxu0 0.0
  %348 = vmatpush1.msra.mxu0 0.0
  %349 = vmatprep.subr.mxu0 0.0
  %350 = vmatpush1.msra.mxu0 0.0
  %351 = vmatprep.subr.mxu0 0.0
  %352 = vmatpush1.msra.mxu0 0.0
  %353 = vmatprep.subr.mxu0 0.0
  %354 = vmatpush1.msra.mxu0 0.0
  %355 = vmatprep.subr.mxu0 0.0
  %356 = vmatpush1.msra.mxu0 0.0
  %357 = vmatprep.subr.mxu0 0.0
  %358 = vmatpush1.msra.mxu0 0.0
  %359 = vmatprep.subr.mxu0 0.0
  %360 = vmatpush1.msra.mxu0 0.0
  %361 = vmatprep.subr.mxu0 0.0
  %362 = vmatpush1.msra.mxu0 0.0
  %363 = vmatprep.subr.mxu0 0.0
  %364 = vmatpush1.msra.mxu0 0.0
  %365 = vmatprep.subr.mxu0 0.0
  %366 = vmatpush1.msra.mxu0 0.0
  %367 = vmatprep.subr.mxu0 0.0
  %368 = vmatpush1.msra.mxu0 0.0
  %369 = vmatprep.subr.mxu0 0.0
  %370 = vmatpush1.msra.mxu0 0.0
  %371 = vmatprep.subr.mxu0 0.0
  %372 = vmatpush1.msra.mxu0 0.0
  %373 = vmatprep.subr.mxu0 0.0
  %374 = vmatpush1.msra.mxu0 0.0
  %375 = vmatprep.subr.mxu0 0.0
  %376 = vmatpush1.msra.mxu0 0.0
  %377 = vmatprep.subr.mxu0 0.0
  %378 = vmatpush1.msra.mxu0 0.0
  %379 = vmatprep.subr.mxu0 0.0
  %380 = vmatpush1.msra.mxu0 0.0
  %381 = vmatprep.subr.mxu0 0.0
  %382 = vmatpush1.msra.mxu0 0.0
  %383 = vmatprep.subr.mxu0 0.0
  %384 = vmatpush1.msra.mxu0 0.0
  %385 = vmatprep.subr.mxu0 0.0
  %386 = vmatpush1.msra.mxu0 0.0
  %387 = vmatprep.subr.mxu0 0.0
  %388 = vmatpush1.msra.mxu0 0.0
  %389 = vmatprep.subr.mxu0 0.0
  %390 = vmatpush1.msra.mxu0 0.0
  %391 = vmatprep.subr.mxu0 0.0
  %392 = vmatpush1.msra.mxu0 0.0
  %393 = vmatprep.subr.mxu0 0.0
  %394 = vmatpush1.msra.mxu0 0.0
  %395 = vmatprep.mubr.f32.mxu0 0.0
  %396 = vmatmul.mubr.f32.gmra.mrb[0].mxu0 %v329
  %v397 = vpop.f32.mrb[0].mxu0
  %v398 = vadd.f32 0.0, %v397
  %v399 = vpop.f32.mrb[0].mxu0
  %v400 = vadd.f32 0.0, %v399
  %401 = vdwg.mxu0
  %v402 = vadd.f32 %v304, %v398
  %v403 = vadd.f32 %v305, %v400
  %404 = vrot.lane.b32.xlu0 %v17, 1
  %v405 = vpop.permute.xlu0 %404
  %406 = vrot.lane.b32.xlu0 %v18, 1
  %v407 = vpop.permute.xlu0 %406
  %vm408 = vcmp.lt.s32.totalorder %v41, 1
  %v409 = vsel %vm408, %v405, %v407
  %v410 = vsel %vm408, %v407, %v405
  %v412 = vlaneseq
  %v413 = vshrl.u32 %v412, 7
  %v414 = vsub.s32 0, %v413
  %v415 = vrot.slane %v25, %v414
  %v416 = vlaneseq
  %v417 = vshrl.u32 %v416, 7
  %v418 = vsub.s32 1, %v417
  %v419 = vrot.slane %v25, %v418
  %v422 = vmul.f32 %v410, %v415
  %v423 = vmul.f32 %v409, %v419
  %s424 = scalar_lea.vmem %s2, 24
  %v425 = vld [vmem:[%s424] sm:$0xff]
  %v427 = vsel %vm59, %v425, 0
  %429 = vmatprep.subr.mxu0 %v423
  %430 = vmatpush1.msra.mxu0 %v422
  %431 = vmatprep.subr.mxu0 0.0
  %432 = vmatpush1.msra.mxu0 0.0
  %433 = vmatprep.subr.mxu0 0.0
  %434 = vmatpush1.msra.mxu0 0.0
  %435 = vmatprep.subr.mxu0 0.0
  %436 = vmatpush1.msra.mxu0 0.0
  %437 = vmatprep.subr.mxu0 0.0
  %438 = vmatpush1.msra.mxu0 0.0
  %439 = vmatprep.subr.mxu0 0.0
  %440 = vmatpush1.msra.mxu0 0.0
  %441 = vmatprep.subr.mxu0 0.0
  %442 = vmatpush1.msra.mxu0 0.0
  %443 = vmatprep.subr.mxu0 0.0
  %444 = vmatpush1.msra.mxu0 0.0
  %445 = vmatprep.subr.mxu0 0.0
  %446 = vmatpush1.msra.mxu0 0.0
  %447 = vmatprep.subr.mxu0 0.0
  %448 = vmatpush1.msra.mxu0 0.0
  %449 = vmatprep.subr.mxu0 0.0
  %450 = vmatpush1.msra.mxu0 0.0
  %451 = vmatprep.subr.mxu0 0.0
  %452 = vmatpush1.msra.mxu0 0.0
  %453 = vmatprep.subr.mxu0 0.0
  %454 = vmatpush1.msra.mxu0 0.0
  %455 = vmatprep.subr.mxu0 0.0
  %456 = vmatpush1.msra.mxu0 0.0
  %457 = vmatprep.subr.mxu0 0.0
  %458 = vmatpush1.msra.mxu0 0.0
  %459 = vmatprep.subr.mxu0 0.0
  %460 = vmatpush1.msra.mxu0 0.0
  %461 = vmatprep.subr.mxu0 0.0
  %462 = vmatpush1.msra.mxu0 0.0
  %463 = vmatprep.subr.mxu0 0.0
  %464 = vmatpush1.msra.mxu0 0.0
  %465 = vmatprep.subr.mxu0 0.0
  %466 = vmatpush1.msra.mxu0 0.0
  %467 = vmatprep.subr.mxu0 0.0
  %468 = vmatpush1.msra.mxu0 0.0
  %469 = vmatprep.subr.mxu0 0.0
  %470 = vmatpush1.msra.mxu0 0.0
  %471 = vmatprep.subr.mxu0 0.0
  %472 = vmatpush1.msra.mxu0 0.0
  %473 = vmatprep.subr.mxu0 0.0
  %474 = vmatpush1.msra.mxu0 0.0
  %475 = vmatprep.subr.mxu0 0.0
  %476 = vmatpush1.msra.mxu0 0.0
  %477 = vmatprep.subr.mxu0 0.0
  %478 = vmatpush1.msra.mxu0 0.0
  %479 = vmatprep.subr.mxu0 0.0
  %480 = vmatpush1.msra.mxu0 0.0
  %481 = vmatprep.subr.mxu0 0.0
  %482 = vmatpush1.msra.mxu0 0.0
  %483 = vmatprep.subr.mxu0 0.0
  %484 = vmatpush1.msra.mxu0 0.0
  %485 = vmatprep.subr.mxu0 0.0
  %486 = vmatpush1.msra.mxu0 0.0
  %487 = vmatprep.subr.mxu0 0.0
  %488 = vmatpush1.msra.mxu0 0.0
  %489 = vmatprep.subr.mxu0 0.0
  %490 = vmatpush1.msra.mxu0 0.0
  %491 = vmatprep.subr.mxu0 0.0
  %492 = vmatpush1.msra.mxu0 0.0
  %493 = vmatprep.mubr.f32.mxu0 0.0
  %494 = vmatmul.mubr.f32.gmra.mrb[0].mxu0 %v427
  %v495 = vpop.f32.mrb[0].mxu0
  %v496 = vadd.f32 0.0, %v495
  %v497 = vpop.f32.mrb[0].mxu0
  %v498 = vadd.f32 0.0, %v497
  %499 = vdwg.mxu0
  %v500 = vadd.f32 %v402, %v496
  %v501 = vadd.f32 %v403, %v498
  %502 = vrot.lane.b32.xlu0 %v17, 127
  %v503 = vpop.permute.xlu0 %502
  %504 = vrot.lane.b32.xlu0 %v18, 127
  %v505 = vpop.permute.xlu0 %504
  %vm506 = vcmp.lt.s32.totalorder %v41, 127
  %v507 = vsel %vm506, %v503, %v505
  %v508 = vsel %vm506, %v505, %v503
  %v510 = vlaneseq
  %v511 = vshrl.u32 %v510, 7
  %v512 = vsub.s32 0, %v511
  %v513 = vrot.slane %v27, %v512
  %v514 = vlaneseq
  %v515 = vshrl.u32 %v514, 7
  %v516 = vsub.s32 1, %v515
  %v517 = vrot.slane %v27, %v516
  %v520 = vmul.f32 %v507, %v513
  %v521 = vmul.f32 %v508, %v517
  %s522 = scalar_lea.vmem %s2, 40
  %v523 = vld [vmem:[%s522] sm:$0xff]
  %v525 = vsel %vm59, %v523, 0
  %527 = vmatprep.subr.mxu0 %v521
  %528 = vmatpush1.msra.mxu0 %v520
  %529 = vmatprep.subr.mxu0 0.0
  %530 = vmatpush1.msra.mxu0 0.0
  %531 = vmatprep.subr.mxu0 0.0
  %532 = vmatpush1.msra.mxu0 0.0
  %533 = vmatprep.subr.mxu0 0.0
  %534 = vmatpush1.msra.mxu0 0.0
  %535 = vmatprep.subr.mxu0 0.0
  %536 = vmatpush1.msra.mxu0 0.0
  %537 = vmatprep.subr.mxu0 0.0
  %538 = vmatpush1.msra.mxu0 0.0
  %539 = vmatprep.subr.mxu0 0.0
  %540 = vmatpush1.msra.mxu0 0.0
  %541 = vmatprep.subr.mxu0 0.0
  %542 = vmatpush1.msra.mxu0 0.0
  %543 = vmatprep.subr.mxu0 0.0
  %544 = vmatpush1.msra.mxu0 0.0
  %545 = vmatprep.subr.mxu0 0.0
  %546 = vmatpush1.msra.mxu0 0.0
  %547 = vmatprep.subr.mxu0 0.0
  %548 = vmatpush1.msra.mxu0 0.0
  %549 = vmatprep.subr.mxu0 0.0
  %550 = vmatpush1.msra.mxu0 0.0
  %551 = vmatprep.subr.mxu0 0.0
  %552 = vmatpush1.msra.mxu0 0.0
  %553 = vmatprep.subr.mxu0 0.0
  %554 = vmatpush1.msra.mxu0 0.0
  %555 = vmatprep.subr.mxu0 0.0
  %556 = vmatpush1.msra.mxu0 0.0
  %557 = vmatprep.subr.mxu0 0.0
  %558 = vmatpush1.msra.mxu0 0.0
  %559 = vmatprep.subr.mxu0 0.0
  %560 = vmatpush1.msra.mxu0 0.0
  %561 = vmatprep.subr.mxu0 0.0
  %562 = vmatpush1.msra.mxu0 0.0
  %563 = vmatprep.subr.mxu0 0.0
  %564 = vmatpush1.msra.mxu0 0.0
  %565 = vmatprep.subr.mxu0 0.0
  %566 = vmatpush1.msra.mxu0 0.0
  %567 = vmatprep.subr.mxu0 0.0
  %568 = vmatpush1.msra.mxu0 0.0
  %569 = vmatprep.subr.mxu0 0.0
  %570 = vmatpush1.msra.mxu0 0.0
  %571 = vmatprep.subr.mxu0 0.0
  %572 = vmatpush1.msra.mxu0 0.0
  %573 = vmatprep.subr.mxu0 0.0
  %574 = vmatpush1.msra.mxu0 0.0
  %575 = vmatprep.subr.mxu0 0.0
  %576 = vmatpush1.msra.mxu0 0.0
  %577 = vmatprep.subr.mxu0 0.0
  %578 = vmatpush1.msra.mxu0 0.0
  %579 = vmatprep.subr.mxu0 0.0
  %580 = vmatpush1.msra.mxu0 0.0
  %581 = vmatprep.subr.mxu0 0.0
  %582 = vmatpush1.msra.mxu0 0.0
  %583 = vmatprep.subr.mxu0 0.0
  %584 = vmatpush1.msra.mxu0 0.0
  %585 = vmatprep.subr.mxu0 0.0
  %586 = vmatpush1.msra.mxu0 0.0
  %587 = vmatprep.subr.mxu0 0.0
  %588 = vmatpush1.msra.mxu0 0.0
  %589 = vmatprep.subr.mxu0 0.0
  %590 = vmatpush1.msra.mxu0 0.0
  %591 = vmatprep.mubr.f32.mxu0 0.0
  %592 = vmatmul.mubr.f32.gmra.mrb[0].mxu0 %v525
  %v593 = vpop.f32.mrb[0].mxu0
  %v594 = vadd.f32 0.0, %v593
  %v595 = vpop.f32.mrb[0].mxu0
  %v596 = vadd.f32 0.0, %v595
  %597 = vdwg.mxu0
  %v598 = vadd.f32 %v500, %v594
  %v599 = vadd.f32 %v501, %v596
  %600 = vrot.lane.b32.xlu0 %v17, 113
  %v601 = vpop.permute.xlu0 %600
  %602 = vrot.lane.b32.xlu0 %v18, 113
  %v603 = vpop.permute.xlu0 %602
  %vm604 = vcmp.lt.s32.totalorder %v41, 113
  %v605 = vsel %vm604, %v601, %v603
  %v606 = vsel %vm604, %v603, %v601
  %v608 = vlaneseq
  %v609 = vshrl.u32 %v608, 7
  %v610 = vsub.s32 0, %v609
  %v611 = vrot.slane %v29, %v610
  %v612 = vlaneseq
  %v613 = vshrl.u32 %v612, 7
  %v614 = vsub.s32 1, %v613
  %v615 = vrot.slane %v29, %v614
  %v618 = vmul.f32 %v605, %v611
  %v619 = vmul.f32 %v606, %v615
  %s620 = scalar_lea.vmem %s2, 48
  %v621 = vld [vmem:[%s620] sm:$0xff]
  %v623 = vsel %vm59, %v621, 0
  %625 = vmatprep.subr.mxu0 %v619
  %626 = vmatpush1.msra.mxu0 %v618
  %627 = vmatprep.subr.mxu0 0.0
  %628 = vmatpush1.msra.mxu0 0.0
  %629 = vmatprep.subr.mxu0 0.0
  %630 = vmatpush1.msra.mxu0 0.0
  %631 = vmatprep.subr.mxu0 0.0
  %632 = vmatpush1.msra.mxu0 0.0
  %633 = vmatprep.subr.mxu0 0.0
  %634 = vmatpush1.msra.mxu0 0.0
  %635 = vmatprep.subr.mxu0 0.0
  %636 = vmatpush1.msra.mxu0 0.0
  %637 = vmatprep.subr.mxu0 0.0
  %638 = vmatpush1.msra.mxu0 0.0
  %639 = vmatprep.subr.mxu0 0.0
  %640 = vmatpush1.msra.mxu0 0.0
  %641 = vmatprep.subr.mxu0 0.0
  %642 = vmatpush1.msra.mxu0 0.0
  %643 = vmatprep.subr.mxu0 0.0
  %644 = vmatpush1.msra.mxu0 0.0
  %645 = vmatprep.subr.mxu0 0.0
  %646 = vmatpush1.msra.mxu0 0.0
  %647 = vmatprep.subr.mxu0 0.0
  %648 = vmatpush1.msra.mxu0 0.0
  %649 = vmatprep.subr.mxu0 0.0
  %650 = vmatpush1.msra.mxu0 0.0
  %651 = vmatprep.subr.mxu0 0.0
  %652 = vmatpush1.msra.mxu0 0.0
  %653 = vmatprep.subr.mxu0 0.0
  %654 = vmatpush1.msra.mxu0 0.0
  %655 = vmatprep.subr.mxu0 0.0
  %656 = vmatpush1.msra.mxu0 0.0
  %657 = vmatprep.subr.mxu0 0.0
  %658 = vmatpush1.msra.mxu0 0.0
  %659 = vmatprep.subr.mxu0 0.0
  %660 = vmatpush1.msra.mxu0 0.0
  %661 = vmatprep.subr.mxu0 0.0
  %662 = vmatpush1.msra.mxu0 0.0
  %663 = vmatprep.subr.mxu0 0.0
  %664 = vmatpush1.msra.mxu0 0.0
  %665 = vmatprep.subr.mxu0 0.0
  %666 = vmatpush1.msra.mxu0 0.0
  %667 = vmatprep.subr.mxu0 0.0
  %668 = vmatpush1.msra.mxu0 0.0
  %669 = vmatprep.subr.mxu0 0.0
  %670 = vmatpush1.msra.mxu0 0.0
  %671 = vmatprep.subr.mxu0 0.0
  %672 = vmatpush1.msra.mxu0 0.0
  %673 = vmatprep.subr.mxu0 0.0
  %674 = vmatpush1.msra.mxu0 0.0
  %675 = vmatprep.subr.mxu0 0.0
  %676 = vmatpush1.msra.mxu0 0.0
  %677 = vmatprep.subr.mxu0 0.0
  %678 = vmatpush1.msra.mxu0 0.0
  %679 = vmatprep.subr.mxu0 0.0
  %680 = vmatpush1.msra.mxu0 0.0
  %681 = vmatprep.subr.mxu0 0.0
  %682 = vmatpush1.msra.mxu0 0.0
  %683 = vmatprep.subr.mxu0 0.0
  %684 = vmatpush1.msra.mxu0 0.0
  %685 = vmatprep.subr.mxu0 0.0
  %686 = vmatpush1.msra.mxu0 0.0
  %687 = vmatprep.subr.mxu0 0.0
  %688 = vmatpush1.msra.mxu0 0.0
  %689 = vmatprep.mubr.f32.mxu0 0.0
  %690 = vmatmul.mubr.f32.gmra.mrb[0].mxu0 %v623
  %v691 = vpop.f32.mrb[0].mxu0
  %v692 = vadd.f32 0.0, %v691
  %v693 = vpop.f32.mrb[0].mxu0
  %v694 = vadd.f32 0.0, %v693
  %695 = vdwg.mxu0
  %v696 = vadd.f32 %v598, %v692
  %v697 = vadd.f32 %v599, %v694
  %698 = vrot.lane.b32.xlu0 %v17, 112
  %v699 = vpop.permute.xlu0 %698
  %700 = vrot.lane.b32.xlu0 %v18, 112
  %v701 = vpop.permute.xlu0 %700
  %vm702 = vcmp.lt.s32.totalorder %v41, 112
  %v703 = vsel %vm702, %v699, %v701
  %v704 = vsel %vm702, %v701, %v699
  %v706 = vlaneseq
  %v707 = vshrl.u32 %v706, 7
  %v708 = vsub.s32 0, %v707
  %v709 = vrot.slane %v31, %v708
  %v710 = vlaneseq
  %v711 = vshrl.u32 %v710, 7
  %v712 = vsub.s32 1, %v711
  %v713 = vrot.slane %v31, %v712
  %v716 = vmul.f32 %v703, %v709
  %v717 = vmul.f32 %v704, %v713
  %s718 = scalar_lea.vmem %s2, 56
  %v719 = vld [vmem:[%s718] sm:$0xff]
  %v721 = vsel %vm59, %v719, 0
  %723 = vmatprep.subr.mxu0 %v717
  %724 = vmatpush1.msra.mxu0 %v716
  %725 = vmatprep.subr.mxu0 0.0
  %726 = vmatpush1.msra.mxu0 0.0
  %727 = vmatprep.subr.mxu0 0.0
  %728 = vmatpush1.msra.mxu0 0.0
  %729 = vmatprep.subr.mxu0 0.0
  %730 = vmatpush1.msra.mxu0 0.0
  %731 = vmatprep.subr.mxu0 0.0
  %732 = vmatpush1.msra.mxu0 0.0
  %733 = vmatprep.subr.mxu0 0.0
  %734 = vmatpush1.msra.mxu0 0.0
  %735 = vmatprep.subr.mxu0 0.0
  %736 = vmatpush1.msra.mxu0 0.0
  %737 = vmatprep.subr.mxu0 0.0
  %738 = vmatpush1.msra.mxu0 0.0
  %739 = vmatprep.subr.mxu0 0.0
  %740 = vmatpush1.msra.mxu0 0.0
  %741 = vmatprep.subr.mxu0 0.0
  %742 = vmatpush1.msra.mxu0 0.0
  %743 = vmatprep.subr.mxu0 0.0
  %744 = vmatpush1.msra.mxu0 0.0
  %745 = vmatprep.subr.mxu0 0.0
  %746 = vmatpush1.msra.mxu0 0.0
  %747 = vmatprep.subr.mxu0 0.0
  %748 = vmatpush1.msra.mxu0 0.0
  %749 = vmatprep.subr.mxu0 0.0
  %750 = vmatpush1.msra.mxu0 0.0
  %751 = vmatprep.subr.mxu0 0.0
  %752 = vmatpush1.msra.mxu0 0.0
  %753 = vmatprep.subr.mxu0 0.0
  %754 = vmatpush1.msra.mxu0 0.0
  %755 = vmatprep.subr.mxu0 0.0
  %756 = vmatpush1.msra.mxu0 0.0
  %757 = vmatprep.subr.mxu0 0.0
  %758 = vmatpush1.msra.mxu0 0.0
  %759 = vmatprep.subr.mxu0 0.0
  %760 = vmatpush1.msra.mxu0 0.0
  %761 = vmatprep.subr.mxu0 0.0
  %762 = vmatpush1.msra.mxu0 0.0
  %763 = vmatprep.subr.mxu0 0.0
  %764 = vmatpush1.msra.mxu0 0.0
  %765 = vmatprep.subr.mxu0 0.0
  %766 = vmatpush1.msra.mxu0 0.0
  %767 = vmatprep.subr.mxu0 0.0
  %768 = vmatpush1.msra.mxu0 0.0
  %769 = vmatprep.subr.mxu0 0.0
  %770 = vmatpush1.msra.mxu0 0.0
  %771 = vmatprep.subr.mxu0 0.0
  %772 = vmatpush1.msra.mxu0 0.0
  %773 = vmatprep.subr.mxu0 0.0
  %774 = vmatpush1.msra.mxu0 0.0
  %775 = vmatprep.subr.mxu0 0.0
  %776 = vmatpush1.msra.mxu0 0.0
  %777 = vmatprep.subr.mxu0 0.0
  %778 = vmatpush1.msra.mxu0 0.0
  %779 = vmatprep.subr.mxu0 0.0
  %780 = vmatpush1.msra.mxu0 0.0
  %781 = vmatprep.subr.mxu0 0.0
  %782 = vmatpush1.msra.mxu0 0.0
  %783 = vmatprep.subr.mxu0 0.0
  %784 = vmatpush1.msra.mxu0 0.0
  %785 = vmatprep.subr.mxu0 0.0
  %786 = vmatpush1.msra.mxu0 0.0
  %787 = vmatprep.mubr.f32.mxu0 0.0
  %788 = vmatmul.mubr.f32.gmra.mrb[0].mxu0 %v721
  %v789 = vpop.f32.mrb[0].mxu0
  %v790 = vadd.f32 0.0, %v789
  %v791 = vpop.f32.mrb[0].mxu0
  %v792 = vadd.f32 0.0, %v791
  %793 = vdwg.mxu0
  %v794 = vadd.f32 %v696, %v790
  %v795 = vadd.f32 %v697, %v792
  %796 = vrot.lane.b32.xlu0 %v17, 111
  %v797 = vpop.permute.xlu0 %796
  %798 = vrot.lane.b32.xlu0 %v18, 111
  %v799 = vpop.permute.xlu0 %798
  %vm800 = vcmp.lt.s32.totalorder %v41, 111
  %v801 = vsel %vm800, %v797, %v799
  %v802 = vsel %vm800, %v799, %v797
  %v804 = vlaneseq
  %v805 = vshrl.u32 %v804, 7
  %v806 = vsub.s32 0, %v805
  %v807 = vrot.slane %v33, %v806
  %v808 = vlaneseq
  %v809 = vshrl.u32 %v808, 7
  %v810 = vsub.s32 1, %v809
  %v811 = vrot.slane %v33, %v810
  %v814 = vmul.f32 %v801, %v807
  %v815 = vmul.f32 %v802, %v811
  %s816 = scalar_lea.vmem %s2, 64
  %v817 = vld [vmem:[%s816] sm:$0xff]
  %v819 = vsel %vm59, %v817, 0
  %821 = vmatprep.subr.mxu0 %v815
  %822 = vmatpush1.msra.mxu0 %v814
  %823 = vmatprep.subr.mxu0 0.0
  %824 = vmatpush1.msra.mxu0 0.0
  %825 = vmatprep.subr.mxu0 0.0
  %826 = vmatpush1.msra.mxu0 0.0
  %827 = vmatprep.subr.mxu0 0.0
  %828 = vmatpush1.msra.mxu0 0.0
  %829 = vmatprep.subr.mxu0 0.0
  %830 = vmatpush1.msra.mxu0 0.0
  %831 = vmatprep.subr.mxu0 0.0
  %832 = vmatpush1.msra.mxu0 0.0
  %833 = vmatprep.subr.mxu0 0.0
  %834 = vmatpush1.msra.mxu0 0.0
  %835 = vmatprep.subr.mxu0 0.0
  %836 = vmatpush1.msra.mxu0 0.0
  %837 = vmatprep.subr.mxu0 0.0
  %838 = vmatpush1.msra.mxu0 0.0
  %839 = vmatprep.subr.mxu0 0.0
  %840 = vmatpush1.msra.mxu0 0.0
  %841 = vmatprep.subr.mxu0 0.0
  %842 = vmatpush1.msra.mxu0 0.0
  %843 = vmatprep.subr.mxu0 0.0
  %844 = vmatpush1.msra.mxu0 0.0
  %845 = vmatprep.subr.mxu0 0.0
  %846 = vmatpush1.msra.mxu0 0.0
  %847 = vmatprep.subr.mxu0 0.0
  %848 = vmatpush1.msra.mxu0 0.0
  %849 = vmatprep.subr.mxu0 0.0
  %850 = vmatpush1.msra.mxu0 0.0
  %851 = vmatprep.subr.mxu0 0.0
  %852 = vmatpush1.msra.mxu0 0.0
  %853 = vmatprep.subr.mxu0 0.0
  %854 = vmatpush1.msra.mxu0 0.0
  %855 = vmatprep.subr.mxu0 0.0
  %856 = vmatpush1.msra.mxu0 0.0
  %857 = vmatprep.subr.mxu0 0.0
  %858 = vmatpush1.msra.mxu0 0.0
  %859 = vmatprep.subr.mxu0 0.0
  %860 = vmatpush1.msra.mxu0 0.0
  %861 = vmatprep.subr.mxu0 0.0
  %862 = vmatpush1.msra.mxu0 0.0
  %863 = vmatprep.subr.mxu0 0.0
  %864 = vmatpush1.msra.mxu0 0.0
  %865 = vmatprep.subr.mxu0 0.0
  %866 = vmatpush1.msra.mxu0 0.0
  %867 = vmatprep.subr.mxu0 0.0
  %868 = vmatpush1.msra.mxu0 0.0
  %869 = vmatprep.subr.mxu0 0.0
  %870 = vmatpush1.msra.mxu0 0.0
  %871 = vmatprep.subr.mxu0 0.0
  %872 = vmatpush1.msra.mxu0 0.0
  %873 = vmatprep.subr.mxu0 0.0
  %874 = vmatpush1.msra.mxu0 0.0
  %875 = vmatprep.subr.mxu0 0.0
  %876 = vmatpush1.msra.mxu0 0.0
  %877 = vmatprep.subr.mxu0 0.0
  %878 = vmatpush1.msra.mxu0 0.0
  %879 = vmatprep.subr.mxu0 0.0
  %880 = vmatpush1.msra.mxu0 0.0
  %881 = vmatprep.subr.mxu0 0.0
  %882 = vmatpush1.msra.mxu0 0.0
  %883 = vmatprep.subr.mxu0 0.0
  %884 = vmatpush1.msra.mxu0 0.0
  %885 = vmatprep.mubr.f32.mxu0 0.0
  %886 = vmatmul.mubr.f32.gmra.mrb[0].mxu0 %v819
  %v887 = vpop.f32.mrb[0].mxu0
  %v888 = vadd.f32 0.0, %v887
  %v889 = vpop.f32.mrb[0].mxu0
  %v890 = vadd.f32 0.0, %v889
  %891 = vdwg.mxu0
  %v892 = vadd.f32 %v794, %v888
  %v893 = vadd.f32 %v795, %v890
  %v894 = vadd.f32 %v892, %v893
  %895 = vadd.xlane.f32.xlu0 %v894
  %v896 = vpop.xlane.xlu0 %895
  %v897 = vrcp.pop 256.0
  %v898 = vmul.f32 %v896, %v897
  %v899 = vsub.f32 %v892, %v898
  %v900 = vsub.f32 %v893, %v898
  %v901 = vmul.f32 %v899, %v899
  %v902 = vmul.f32 %v900, %v900
  %v903 = vadd.f32 %v901, %v902
  %904 = vadd.xlane.f32.xlu0 %v903
  %v905 = vpop.xlane.xlu0 %904
  %v906 = vmul.f32 %v905, %v897
  %v907 = vadd.f32 %v906, 1e-05
  %v908 = vrsqrt.pop %v907
  %v909 = vmul.f32 %v899, %v908
  %v910 = vmul.f32 %v900, %v908
  %v911 = vmax.f32 %v909, 0.0
  %v912 = vmax.f32 %v910, 0.0
  %s913 = scalar_lea.vmem %s3, 32
  %v914 = vld [vmem:[%s913] sm:$0xff]
  %915 = vrot.lane.b32.xlu0 %v911, 17
  %v916 = vpop.permute.xlu0 %915
  %917 = vrot.lane.b32.xlu0 %v912, 17
  %v918 = vpop.permute.xlu0 %917
  %v919 = vsel %vm42, %v916, %v918
  %v920 = vsel %vm42, %v918, %v916
  %v921 = vmul.f32 %v920, %v49
  %v922 = vmul.f32 %v919, %v53
  %v923 = vld [vmem:[%s3] sm:$0xff]
  %v925 = vsel %vm59, %v923, 0
  %927 = vmatprep.subr.mxu0 %v922
  %928 = vmatpush1.msra.mxu0 %v921
  %929 = vmatprep.subr.mxu0 0.0
  %930 = vmatpush1.msra.mxu0 0.0
  %931 = vmatprep.subr.mxu0 0.0
  %932 = vmatpush1.msra.mxu0 0.0
  %933 = vmatprep.subr.mxu0 0.0
  %934 = vmatpush1.msra.mxu0 0.0
  %935 = vmatprep.subr.mxu0 0.0
  %936 = vmatpush1.msra.mxu0 0.0
  %937 = vmatprep.subr.mxu0 0.0
  %938 = vmatpush1.msra.mxu0 0.0
  %939 = vmatprep.subr.mxu0 0.0
  %940 = vmatpush1.msra.mxu0 0.0
  %941 = vmatprep.subr.mxu0 0.0
  %942 = vmatpush1.msra.mxu0 0.0
  %943 = vmatprep.subr.mxu0 0.0
  %944 = vmatpush1.msra.mxu0 0.0
  %945 = vmatprep.subr.mxu0 0.0
  %946 = vmatpush1.msra.mxu0 0.0
  %947 = vmatprep.subr.mxu0 0.0
  %948 = vmatpush1.msra.mxu0 0.0
  %949 = vmatprep.subr.mxu0 0.0
  %950 = vmatpush1.msra.mxu0 0.0
  %951 = vmatprep.subr.mxu0 0.0
  %952 = vmatpush1.msra.mxu0 0.0
  %953 = vmatprep.subr.mxu0 0.0
  %954 = vmatpush1.msra.mxu0 0.0
  %955 = vmatprep.subr.mxu0 0.0
  %956 = vmatpush1.msra.mxu0 0.0
  %957 = vmatprep.subr.mxu0 0.0
  %958 = vmatpush1.msra.mxu0 0.0
  %959 = vmatprep.subr.mxu0 0.0
  %960 = vmatpush1.msra.mxu0 0.0
  %961 = vmatprep.subr.mxu0 0.0
  %962 = vmatpush1.msra.mxu0 0.0
  %963 = vmatprep.subr.mxu0 0.0
  %964 = vmatpush1.msra.mxu0 0.0
  %965 = vmatprep.subr.mxu0 0.0
  %966 = vmatpush1.msra.mxu0 0.0
  %967 = vmatprep.subr.mxu0 0.0
  %968 = vmatpush1.msra.mxu0 0.0
  %969 = vmatprep.subr.mxu0 0.0
  %970 = vmatpush1.msra.mxu0 0.0
  %971 = vmatprep.subr.mxu0 0.0
  %972 = vmatpush1.msra.mxu0 0.0
  %973 = vmatprep.subr.mxu0 0.0
  %974 = vmatpush1.msra.mxu0 0.0
  %975 = vmatprep.subr.mxu0 0.0
  %976 = vmatpush1.msra.mxu0 0.0
  %977 = vmatprep.subr.mxu0 0.0
  %978 = vmatpush1.msra.mxu0 0.0
  %979 = vmatprep.subr.mxu0 0.0
  %980 = vmatpush1.msra.mxu0 0.0
  %981 = vmatprep.subr.mxu0 0.0
  %982 = vmatpush1.msra.mxu0 0.0
  %983 = vmatprep.subr.mxu0 0.0
  %984 = vmatpush1.msra.mxu0 0.0
  %985 = vmatprep.subr.mxu0 0.0
  %986 = vmatpush1.msra.mxu0 0.0
  %987 = vmatprep.subr.mxu0 0.0
  %988 = vmatpush1.msra.mxu0 0.0
  %989 = vmatprep.subr.mxu0 0.0
  %990 = vmatpush1.msra.mxu0 0.0
  %991 = vmatprep.mubr.f32.mxu0 0.0
  %992 = vmatmul.mubr.f32.gmra.mrb[0].mxu0 %v925
  %v993 = vpop.f32.mrb[0].mxu0
  %v994 = vadd.f32 0.0, %v993
  %v995 = vpop.f32.mrb[0].mxu0
  %v996 = vadd.f32 0.0, %v995
  %997 = vdwg.mxu0
  %v999 = vsel %vm59, %v914, 0
  %1001 = vmatprep.subr.mxu0 %v912
  %1002 = vmatpush1.msra.mxu0 %v911
  %1003 = vmatprep.subr.mxu0 0.0
  %1004 = vmatpush1.msra.mxu0 0.0
  %1005 = vmatprep.subr.mxu0 0.0
  %1006 = vmatpush1.msra.mxu0 0.0
  %1007 = vmatprep.subr.mxu0 0.0
  %1008 = vmatpush1.msra.mxu0 0.0
  %1009 = vmatprep.subr.mxu0 0.0
  %1010 = vmatpush1.msra.mxu0 0.0
  %1011 = vmatprep.subr.mxu0 0.0
  %1012 = vmatpush1.msra.mxu0 0.0
  %1013 = vmatprep.subr.mxu0 0.0
  %1014 = vmatpush1.msra.mxu0 0.0
  %1015 = vmatprep.subr.mxu0 0.0
  %1016 = vmatpush1.msra.mxu0 0.0
  %1017 = vmatprep.subr.mxu0 0.0
  %1018 = vmatpush1.msra.mxu0 0.0
  %1019 = vmatprep.subr.mxu0 0.0
  %1020 = vmatpush1.msra.mxu0 0.0
  %1021 = vmatprep.subr.mxu0 0.0
  %1022 = vmatpush1.msra.mxu0 0.0
  %1023 = vmatprep.subr.mxu0 0.0
  %1024 = vmatpush1.msra.mxu0 0.0
  %1025 = vmatprep.subr.mxu0 0.0
  %1026 = vmatpush1.msra.mxu0 0.0
  %1027 = vmatprep.subr.mxu0 0.0
  %1028 = vmatpush1.msra.mxu0 0.0
  %1029 = vmatprep.subr.mxu0 0.0
  %1030 = vmatpush1.msra.mxu0 0.0
  %1031 = vmatprep.subr.mxu0 0.0
  %1032 = vmatpush1.msra.mxu0 0.0
  %1033 = vmatprep.subr.mxu0 0.0
  %1034 = vmatpush1.msra.mxu0 0.0
  %1035 = vmatprep.subr.mxu0 0.0
  %1036 = vmatpush1.msra.mxu0 0.0
  %1037 = vmatprep.subr.mxu0 0.0
  %1038 = vmatpush1.msra.mxu0 0.0
  %1039 = vmatprep.subr.mxu0 0.0
  %1040 = vmatpush1.msra.mxu0 0.0
  %1041 = vmatprep.subr.mxu0 0.0
  %1042 = vmatpush1.msra.mxu0 0.0
  %1043 = vmatprep.subr.mxu0 0.0
  %1044 = vmatpush1.msra.mxu0 0.0
  %1045 = vmatprep.subr.mxu0 0.0
  %1046 = vmatpush1.msra.mxu0 0.0
  %1047 = vmatprep.subr.mxu0 0.0
  %1048 = vmatpush1.msra.mxu0 0.0
  %1049 = vmatprep.subr.mxu0 0.0
  %1050 = vmatpush1.msra.mxu0 0.0
  %1051 = vmatprep.subr.mxu0 0.0
  %1052 = vmatpush1.msra.mxu0 0.0
  %1053 = vmatprep.subr.mxu0 0.0
  %1054 = vmatpush1.msra.mxu0 0.0
  %1055 = vmatprep.subr.mxu0 0.0
  %1056 = vmatpush1.msra.mxu0 0.0
  %1057 = vmatprep.subr.mxu0 0.0
  %1058 = vmatpush1.msra.mxu0 0.0
  %1059 = vmatprep.subr.mxu0 0.0
  %1060 = vmatpush1.msra.mxu0 0.0
  %1061 = vmatprep.subr.mxu0 0.0
  %1062 = vmatpush1.msra.mxu0 0.0
  %1063 = vmatprep.subr.mxu0 0.0
  %1064 = vmatpush1.msra.mxu0 0.0
  %1065 = vmatprep.mubr.f32.mxu0 0.0
  %1066 = vmatmul.mubr.f32.gmra.mrb[0].mxu0 %v999
  %v1067 = vpop.f32.mrb[0].mxu0
  %v1068 = vadd.f32 %v994, %v1067
  %v1069 = vpop.f32.mrb[0].mxu0
  %v1070 = vadd.f32 %v996, %v1069
  %1071 = vdwg.mxu0
  %1072 = vrot.lane.b32.xlu0 %v911, 16
  %v1073 = vpop.permute.xlu0 %1072
  %1074 = vrot.lane.b32.xlu0 %v912, 16
  %v1075 = vpop.permute.xlu0 %1074
  %v1076 = vsel %vm212, %v1073, %v1075
  %v1077 = vsel %vm212, %v1075, %v1073
  %v1078 = vmul.f32 %v1077, %v219
  %v1079 = vmul.f32 %v1076, %v223
  %s1080 = scalar_lea.vmem %s3, 8
  %v1081 = vld [vmem:[%s1080] sm:$0xff]
  %v1083 = vsel %vm59, %v1081, 0
  %1085 = vmatprep.subr.mxu0 %v1079
  %1086 = vmatpush1.msra.mxu0 %v1078
  %1087 = vmatprep.subr.mxu0 0.0
  %1088 = vmatpush1.msra.mxu0 0.0
  %1089 = vmatprep.subr.mxu0 0.0
  %1090 = vmatpush1.msra.mxu0 0.0
  %1091 = vmatprep.subr.mxu0 0.0
  %1092 = vmatpush1.msra.mxu0 0.0
  %1093 = vmatprep.subr.mxu0 0.0
  %1094 = vmatpush1.msra.mxu0 0.0
  %1095 = vmatprep.subr.mxu0 0.0
  %1096 = vmatpush1.msra.mxu0 0.0
  %1097 = vmatprep.subr.mxu0 0.0
  %1098 = vmatpush1.msra.mxu0 0.0
  %1099 = vmatprep.subr.mxu0 0.0
  %1100 = vmatpush1.msra.mxu0 0.0
  %1101 = vmatprep.subr.mxu0 0.0
  %1102 = vmatpush1.msra.mxu0 0.0
  %1103 = vmatprep.subr.mxu0 0.0
  %1104 = vmatpush1.msra.mxu0 0.0
  %1105 = vmatprep.subr.mxu0 0.0
  %1106 = vmatpush1.msra.mxu0 0.0
  %1107 = vmatprep.subr.mxu0 0.0
  %1108 = vmatpush1.msra.mxu0 0.0
  %1109 = vmatprep.subr.mxu0 0.0
  %1110 = vmatpush1.msra.mxu0 0.0
  %1111 = vmatprep.subr.mxu0 0.0
  %1112 = vmatpush1.msra.mxu0 0.0
  %1113 = vmatprep.subr.mxu0 0.0
  %1114 = vmatpush1.msra.mxu0 0.0
  %1115 = vmatprep.subr.mxu0 0.0
  %1116 = vmatpush1.msra.mxu0 0.0
  %1117 = vmatprep.subr.mxu0 0.0
  %1118 = vmatpush1.msra.mxu0 0.0
  %1119 = vmatprep.subr.mxu0 0.0
  %1120 = vmatpush1.msra.mxu0 0.0
  %1121 = vmatprep.subr.mxu0 0.0
  %1122 = vmatpush1.msra.mxu0 0.0
  %1123 = vmatprep.subr.mxu0 0.0
  %1124 = vmatpush1.msra.mxu0 0.0
  %1125 = vmatprep.subr.mxu0 0.0
  %1126 = vmatpush1.msra.mxu0 0.0
  %1127 = vmatprep.subr.mxu0 0.0
  %1128 = vmatpush1.msra.mxu0 0.0
  %1129 = vmatprep.subr.mxu0 0.0
  %1130 = vmatpush1.msra.mxu0 0.0
  %1131 = vmatprep.subr.mxu0 0.0
  %1132 = vmatpush1.msra.mxu0 0.0
  %1133 = vmatprep.subr.mxu0 0.0
  %1134 = vmatpush1.msra.mxu0 0.0
  %1135 = vmatprep.subr.mxu0 0.0
  %1136 = vmatpush1.msra.mxu0 0.0
  %1137 = vmatprep.subr.mxu0 0.0
  %1138 = vmatpush1.msra.mxu0 0.0
  %1139 = vmatprep.subr.mxu0 0.0
  %1140 = vmatpush1.msra.mxu0 0.0
  %1141 = vmatprep.subr.mxu0 0.0
  %1142 = vmatpush1.msra.mxu0 0.0
  %1143 = vmatprep.subr.mxu0 0.0
  %1144 = vmatpush1.msra.mxu0 0.0
  %1145 = vmatprep.subr.mxu0 0.0
  %1146 = vmatpush1.msra.mxu0 0.0
  %1147 = vmatprep.subr.mxu0 0.0
  %1148 = vmatpush1.msra.mxu0 0.0
  %1149 = vmatprep.mubr.f32.mxu0 0.0
  %1150 = vmatmul.mubr.f32.gmra.mrb[0].mxu0 %v1083
  %v1151 = vpop.f32.mrb[0].mxu0
  %v1152 = vadd.f32 0.0, %v1151
  %v1153 = vpop.f32.mrb[0].mxu0
  %v1154 = vadd.f32 0.0, %v1153
  %1155 = vdwg.mxu0
  %v1156 = vadd.f32 %v1068, %v1152
  %v1157 = vadd.f32 %v1070, %v1154
  %1158 = vrot.lane.b32.xlu0 %v911, 15
  %v1159 = vpop.permute.xlu0 %1158
  %1160 = vrot.lane.b32.xlu0 %v912, 15
  %v1161 = vpop.permute.xlu0 %1160
  %v1162 = vsel %vm310, %v1159, %v1161
  %v1163 = vsel %vm310, %v1161, %v1159
  %v1164 = vmul.f32 %v1163, %v317
  %v1165 = vmul.f32 %v1162, %v321
  %s1166 = scalar_lea.vmem %s3, 16
  %v1167 = vld [vmem:[%s1166] sm:$0xff]
  %v1169 = vsel %vm59, %v1167, 0
  %1171 = vmatprep.subr.mxu0 %v1165
  %1172 = vmatpush1.msra.mxu0 %v1164
  %1173 = vmatprep.subr.mxu0 0.0
  %1174 = vmatpush1.msra.mxu0 0.0
  %1175 = vmatprep.subr.mxu0 0.0
  %1176 = vmatpush1.msra.mxu0 0.0
  %1177 = vmatprep.subr.mxu0 0.0
  %1178 = vmatpush1.msra.mxu0 0.0
  %1179 = vmatprep.subr.mxu0 0.0
  %1180 = vmatpush1.msra.mxu0 0.0
  %1181 = vmatprep.subr.mxu0 0.0
  %1182 = vmatpush1.msra.mxu0 0.0
  %1183 = vmatprep.subr.mxu0 0.0
  %1184 = vmatpush1.msra.mxu0 0.0
  %1185 = vmatprep.subr.mxu0 0.0
  %1186 = vmatpush1.msra.mxu0 0.0
  %1187 = vmatprep.subr.mxu0 0.0
  %1188 = vmatpush1.msra.mxu0 0.0
  %1189 = vmatprep.subr.mxu0 0.0
  %1190 = vmatpush1.msra.mxu0 0.0
  %1191 = vmatprep.subr.mxu0 0.0
  %1192 = vmatpush1.msra.mxu0 0.0
  %1193 = vmatprep.subr.mxu0 0.0
  %1194 = vmatpush1.msra.mxu0 0.0
  %1195 = vmatprep.subr.mxu0 0.0
  %1196 = vmatpush1.msra.mxu0 0.0
  %1197 = vmatprep.subr.mxu0 0.0
  %1198 = vmatpush1.msra.mxu0 0.0
  %1199 = vmatprep.subr.mxu0 0.0
  %1200 = vmatpush1.msra.mxu0 0.0
  %1201 = vmatprep.subr.mxu0 0.0
  %1202 = vmatpush1.msra.mxu0 0.0
  %1203 = vmatprep.subr.mxu0 0.0
  %1204 = vmatpush1.msra.mxu0 0.0
  %1205 = vmatprep.subr.mxu0 0.0
  %1206 = vmatpush1.msra.mxu0 0.0
  %1207 = vmatprep.subr.mxu0 0.0
  %1208 = vmatpush1.msra.mxu0 0.0
  %1209 = vmatprep.subr.mxu0 0.0
  %1210 = vmatpush1.msra.mxu0 0.0
  %1211 = vmatprep.subr.mxu0 0.0
  %1212 = vmatpush1.msra.mxu0 0.0
  %1213 = vmatprep.subr.mxu0 0.0
  %1214 = vmatpush1.msra.mxu0 0.0
  %1215 = vmatprep.subr.mxu0 0.0
  %1216 = vmatpush1.msra.mxu0 0.0
  %1217 = vmatprep.subr.mxu0 0.0
  %1218 = vmatpush1.msra.mxu0 0.0
  %1219 = vmatprep.subr.mxu0 0.0
  %1220 = vmatpush1.msra.mxu0 0.0
  %1221 = vmatprep.subr.mxu0 0.0
  %1222 = vmatpush1.msra.mxu0 0.0
  %1223 = vmatprep.subr.mxu0 0.0
  %1224 = vmatpush1.msra.mxu0 0.0
  %1225 = vmatprep.subr.mxu0 0.0
  %1226 = vmatpush1.msra.mxu0 0.0
  %1227 = vmatprep.subr.mxu0 0.0
  %1228 = vmatpush1.msra.mxu0 0.0
  %1229 = vmatprep.subr.mxu0 0.0
  %1230 = vmatpush1.msra.mxu0 0.0
  %1231 = vmatprep.subr.mxu0 0.0
  %1232 = vmatpush1.msra.mxu0 0.0
  %1233 = vmatprep.subr.mxu0 0.0
  %1234 = vmatpush1.msra.mxu0 0.0
  %1235 = vmatprep.mubr.f32.mxu0 0.0
  %1236 = vmatmul.mubr.f32.gmra.mrb[0].mxu0 %v1169
  %v1237 = vpop.f32.mrb[0].mxu0
  %v1238 = vadd.f32 0.0, %v1237
  %v1239 = vpop.f32.mrb[0].mxu0
  %v1240 = vadd.f32 0.0, %v1239
  %1241 = vdwg.mxu0
  %v1242 = vadd.f32 %v1156, %v1238
  %v1243 = vadd.f32 %v1157, %v1240
  %1244 = vrot.lane.b32.xlu0 %v911, 1
  %v1245 = vpop.permute.xlu0 %1244
  %1246 = vrot.lane.b32.xlu0 %v912, 1
  %v1247 = vpop.permute.xlu0 %1246
  %v1248 = vsel %vm408, %v1245, %v1247
  %v1249 = vsel %vm408, %v1247, %v1245
  %v1250 = vmul.f32 %v1249, %v415
  %v1251 = vmul.f32 %v1248, %v419
  %s1252 = scalar_lea.vmem %s3, 24
  %v1253 = vld [vmem:[%s1252] sm:$0xff]
  %v1255 = vsel %vm59, %v1253, 0
  %1257 = vmatprep.subr.mxu0 %v1251
  %1258 = vmatpush1.msra.mxu0 %v1250
  %1259 = vmatprep.subr.mxu0 0.0
  %1260 = vmatpush1.msra.mxu0 0.0
  %1261 = vmatprep.subr.mxu0 0.0
  %1262 = vmatpush1.msra.mxu0 0.0
  %1263 = vmatprep.subr.mxu0 0.0
  %1264 = vmatpush1.msra.mxu0 0.0
  %1265 = vmatprep.subr.mxu0 0.0
  %1266 = vmatpush1.msra.mxu0 0.0
  %1267 = vmatprep.subr.mxu0 0.0
  %1268 = vmatpush1.msra.mxu0 0.0
  %1269 = vmatprep.subr.mxu0 0.0
  %1270 = vmatpush1.msra.mxu0 0.0
  %1271 = vmatprep.subr.mxu0 0.0
  %1272 = vmatpush1.msra.mxu0 0.0
  %1273 = vmatprep.subr.mxu0 0.0
  %1274 = vmatpush1.msra.mxu0 0.0
  %1275 = vmatprep.subr.mxu0 0.0
  %1276 = vmatpush1.msra.mxu0 0.0
  %1277 = vmatprep.subr.mxu0 0.0
  %1278 = vmatpush1.msra.mxu0 0.0
  %1279 = vmatprep.subr.mxu0 0.0
  %1280 = vmatpush1.msra.mxu0 0.0
  %1281 = vmatprep.subr.mxu0 0.0
  %1282 = vmatpush1.msra.mxu0 0.0
  %1283 = vmatprep.subr.mxu0 0.0
  %1284 = vmatpush1.msra.mxu0 0.0
  %1285 = vmatprep.subr.mxu0 0.0
  %1286 = vmatpush1.msra.mxu0 0.0
  %1287 = vmatprep.subr.mxu0 0.0
  %1288 = vmatpush1.msra.mxu0 0.0
  %1289 = vmatprep.subr.mxu0 0.0
  %1290 = vmatpush1.msra.mxu0 0.0
  %1291 = vmatprep.subr.mxu0 0.0
  %1292 = vmatpush1.msra.mxu0 0.0
  %1293 = vmatprep.subr.mxu0 0.0
  %1294 = vmatpush1.msra.mxu0 0.0
  %1295 = vmatprep.subr.mxu0 0.0
  %1296 = vmatpush1.msra.mxu0 0.0
  %1297 = vmatprep.subr.mxu0 0.0
  %1298 = vmatpush1.msra.mxu0 0.0
  %1299 = vmatprep.subr.mxu0 0.0
  %1300 = vmatpush1.msra.mxu0 0.0
  %1301 = vmatprep.subr.mxu0 0.0
  %1302 = vmatpush1.msra.mxu0 0.0
  %1303 = vmatprep.subr.mxu0 0.0
  %1304 = vmatpush1.msra.mxu0 0.0
  %1305 = vmatprep.subr.mxu0 0.0
  %1306 = vmatpush1.msra.mxu0 0.0
  %1307 = vmatprep.subr.mxu0 0.0
  %1308 = vmatpush1.msra.mxu0 0.0
  %1309 = vmatprep.subr.mxu0 0.0
  %1310 = vmatpush1.msra.mxu0 0.0
  %1311 = vmatprep.subr.mxu0 0.0
  %1312 = vmatpush1.msra.mxu0 0.0
  %1313 = vmatprep.subr.mxu0 0.0
  %1314 = vmatpush1.msra.mxu0 0.0
  %1315 = vmatprep.subr.mxu0 0.0
  %1316 = vmatpush1.msra.mxu0 0.0
  %1317 = vmatprep.subr.mxu0 0.0
  %1318 = vmatpush1.msra.mxu0 0.0
  %1319 = vmatprep.subr.mxu0 0.0
  %1320 = vmatpush1.msra.mxu0 0.0
  %1321 = vmatprep.mubr.f32.mxu0 0.0
  %1322 = vmatmul.mubr.f32.gmra.mrb[0].mxu0 %v1255
  %v1323 = vpop.f32.mrb[0].mxu0
  %v1324 = vadd.f32 0.0, %v1323
  %v1325 = vpop.f32.mrb[0].mxu0
  %v1326 = vadd.f32 0.0, %v1325
  %1327 = vdwg.mxu0
  %v1328 = vadd.f32 %v1242, %v1324
  %v1329 = vadd.f32 %v1243, %v1326
  %1330 = vrot.lane.b32.xlu0 %v911, 127
  %v1331 = vpop.permute.xlu0 %1330
  %1332 = vrot.lane.b32.xlu0 %v912, 127
  %v1333 = vpop.permute.xlu0 %1332
  %v1334 = vsel %vm506, %v1331, %v1333
  %v1335 = vsel %vm506, %v1333, %v1331
  %v1336 = vmul.f32 %v1334, %v513
  %v1337 = vmul.f32 %v1335, %v517
  %s1338 = scalar_lea.vmem %s3, 40
  %v1339 = vld [vmem:[%s1338] sm:$0xff]
  %v1341 = vsel %vm59, %v1339, 0
  %1343 = vmatprep.subr.mxu0 %v1337
  %1344 = vmatpush1.msra.mxu0 %v1336
  %1345 = vmatprep.subr.mxu0 0.0
  %1346 = vmatpush1.msra.mxu0 0.0
  %1347 = vmatprep.subr.mxu0 0.0
  %1348 = vmatpush1.msra.mxu0 0.0
  %1349 = vmatprep.subr.mxu0 0.0
  %1350 = vmatpush1.msra.mxu0 0.0
  %1351 = vmatprep.subr.mxu0 0.0
  %1352 = vmatpush1.msra.mxu0 0.0
  %1353 = vmatprep.subr.mxu0 0.0
  %1354 = vmatpush1.msra.mxu0 0.0
  %1355 = vmatprep.subr.mxu0 0.0
  %1356 = vmatpush1.msra.mxu0 0.0
  %1357 = vmatprep.subr.mxu0 0.0
  %1358 = vmatpush1.msra.mxu0 0.0
  %1359 = vmatprep.subr.mxu0 0.0
  %1360 = vmatpush1.msra.mxu0 0.0
  %1361 = vmatprep.subr.mxu0 0.0
  %1362 = vmatpush1.msra.mxu0 0.0
  %1363 = vmatprep.subr.mxu0 0.0
  %1364 = vmatpush1.msra.mxu0 0.0
  %1365 = vmatprep.subr.mxu0 0.0
  %1366 = vmatpush1.msra.mxu0 0.0
  %1367 = vmatprep.subr.mxu0 0.0
  %1368 = vmatpush1.msra.mxu0 0.0
  %1369 = vmatprep.subr.mxu0 0.0
  %1370 = vmatpush1.msra.mxu0 0.0
  %1371 = vmatprep.subr.mxu0 0.0
  %1372 = vmatpush1.msra.mxu0 0.0
  %1373 = vmatprep.subr.mxu0 0.0
  %1374 = vmatpush1.msra.mxu0 0.0
  %1375 = vmatprep.subr.mxu0 0.0
  %1376 = vmatpush1.msra.mxu0 0.0
  %1377 = vmatprep.subr.mxu0 0.0
  %1378 = vmatpush1.msra.mxu0 0.0
  %1379 = vmatprep.subr.mxu0 0.0
  %1380 = vmatpush1.msra.mxu0 0.0
  %1381 = vmatprep.subr.mxu0 0.0
  %1382 = vmatpush1.msra.mxu0 0.0
  %1383 = vmatprep.subr.mxu0 0.0
  %1384 = vmatpush1.msra.mxu0 0.0
  %1385 = vmatprep.subr.mxu0 0.0
  %1386 = vmatpush1.msra.mxu0 0.0
  %1387 = vmatprep.subr.mxu0 0.0
  %1388 = vmatpush1.msra.mxu0 0.0
  %1389 = vmatprep.subr.mxu0 0.0
  %1390 = vmatpush1.msra.mxu0 0.0
  %1391 = vmatprep.subr.mxu0 0.0
  %1392 = vmatpush1.msra.mxu0 0.0
  %1393 = vmatprep.subr.mxu0 0.0
  %1394 = vmatpush1.msra.mxu0 0.0
  %1395 = vmatprep.subr.mxu0 0.0
  %1396 = vmatpush1.msra.mxu0 0.0
  %1397 = vmatprep.subr.mxu0 0.0
  %1398 = vmatpush1.msra.mxu0 0.0
  %1399 = vmatprep.subr.mxu0 0.0
  %1400 = vmatpush1.msra.mxu0 0.0
  %1401 = vmatprep.subr.mxu0 0.0
  %1402 = vmatpush1.msra.mxu0 0.0
  %1403 = vmatprep.subr.mxu0 0.0
  %1404 = vmatpush1.msra.mxu0 0.0
  %1405 = vmatprep.subr.mxu0 0.0
  %1406 = vmatpush1.msra.mxu0 0.0
  %1407 = vmatprep.mubr.f32.mxu0 0.0
  %1408 = vmatmul.mubr.f32.gmra.mrb[0].mxu0 %v1341
  %v1409 = vpop.f32.mrb[0].mxu0
  %v1410 = vadd.f32 0.0, %v1409
  %v1411 = vpop.f32.mrb[0].mxu0
  %v1412 = vadd.f32 0.0, %v1411
  %1413 = vdwg.mxu0
  %v1414 = vadd.f32 %v1328, %v1410
  %v1415 = vadd.f32 %v1329, %v1412
  %1416 = vrot.lane.b32.xlu0 %v911, 113
  %v1417 = vpop.permute.xlu0 %1416
  %1418 = vrot.lane.b32.xlu0 %v912, 113
  %v1419 = vpop.permute.xlu0 %1418
  %v1420 = vsel %vm604, %v1417, %v1419
  %v1421 = vsel %vm604, %v1419, %v1417
  %v1422 = vmul.f32 %v1420, %v611
  %v1423 = vmul.f32 %v1421, %v615
  %s1424 = scalar_lea.vmem %s3, 48
  %v1425 = vld [vmem:[%s1424] sm:$0xff]
  %v1427 = vsel %vm59, %v1425, 0
  %1429 = vmatprep.subr.mxu0 %v1423
  %1430 = vmatpush1.msra.mxu0 %v1422
  %1431 = vmatprep.subr.mxu0 0.0
  %1432 = vmatpush1.msra.mxu0 0.0
  %1433 = vmatprep.subr.mxu0 0.0
  %1434 = vmatpush1.msra.mxu0 0.0
  %1435 = vmatprep.subr.mxu0 0.0
  %1436 = vmatpush1.msra.mxu0 0.0
  %1437 = vmatprep.subr.mxu0 0.0
  %1438 = vmatpush1.msra.mxu0 0.0
  %1439 = vmatprep.subr.mxu0 0.0
  %1440 = vmatpush1.msra.mxu0 0.0
  %1441 = vmatprep.subr.mxu0 0.0
  %1442 = vmatpush1.msra.mxu0 0.0
  %1443 = vmatprep.subr.mxu0 0.0
  %1444 = vmatpush1.msra.mxu0 0.0
  %1445 = vmatprep.subr.mxu0 0.0
  %1446 = vmatpush1.msra.mxu0 0.0
  %1447 = vmatprep.subr.mxu0 0.0
  %1448 = vmatpush1.msra.mxu0 0.0
  %1449 = vmatprep.subr.mxu0 0.0
  %1450 = vmatpush1.msra.mxu0 0.0
  %1451 = vmatprep.subr.mxu0 0.0
  %1452 = vmatpush1.msra.mxu0 0.0
  %1453 = vmatprep.subr.mxu0 0.0
  %1454 = vmatpush1.msra.mxu0 0.0
  %1455 = vmatprep.subr.mxu0 0.0
  %1456 = vmatpush1.msra.mxu0 0.0
  %1457 = vmatprep.subr.mxu0 0.0
  %1458 = vmatpush1.msra.mxu0 0.0
  %1459 = vmatprep.subr.mxu0 0.0
  %1460 = vmatpush1.msra.mxu0 0.0
  %1461 = vmatprep.subr.mxu0 0.0
  %1462 = vmatpush1.msra.mxu0 0.0
  %1463 = vmatprep.subr.mxu0 0.0
  %1464 = vmatpush1.msra.mxu0 0.0
  %1465 = vmatprep.subr.mxu0 0.0
  %1466 = vmatpush1.msra.mxu0 0.0
  %1467 = vmatprep.subr.mxu0 0.0
  %1468 = vmatpush1.msra.mxu0 0.0
  %1469 = vmatprep.subr.mxu0 0.0
  %1470 = vmatpush1.msra.mxu0 0.0
  %1471 = vmatprep.subr.mxu0 0.0
  %1472 = vmatpush1.msra.mxu0 0.0
  %1473 = vmatprep.subr.mxu0 0.0
  %1474 = vmatpush1.msra.mxu0 0.0
  %1475 = vmatprep.subr.mxu0 0.0
  %1476 = vmatpush1.msra.mxu0 0.0
  %1477 = vmatprep.subr.mxu0 0.0
  %1478 = vmatpush1.msra.mxu0 0.0
  %1479 = vmatprep.subr.mxu0 0.0
  %1480 = vmatpush1.msra.mxu0 0.0
  %1481 = vmatprep.subr.mxu0 0.0
  %1482 = vmatpush1.msra.mxu0 0.0
  %1483 = vmatprep.subr.mxu0 0.0
  %1484 = vmatpush1.msra.mxu0 0.0
  %1485 = vmatprep.subr.mxu0 0.0
  %1486 = vmatpush1.msra.mxu0 0.0
  %1487 = vmatprep.subr.mxu0 0.0
  %1488 = vmatpush1.msra.mxu0 0.0
  %1489 = vmatprep.subr.mxu0 0.0
  %1490 = vmatpush1.msra.mxu0 0.0
  %1491 = vmatprep.subr.mxu0 0.0
  %1492 = vmatpush1.msra.mxu0 0.0
  %1493 = vmatprep.mubr.f32.mxu0 0.0
  %1494 = vmatmul.mubr.f32.gmra.mrb[0].mxu0 %v1427
  %v1495 = vpop.f32.mrb[0].mxu0
  %v1496 = vadd.f32 0.0, %v1495
  %v1497 = vpop.f32.mrb[0].mxu0
  %v1498 = vadd.f32 0.0, %v1497
  %1499 = vdwg.mxu0
  %v1500 = vadd.f32 %v1414, %v1496
  %v1501 = vadd.f32 %v1415, %v1498
  %1502 = vrot.lane.b32.xlu0 %v911, 112
  %v1503 = vpop.permute.xlu0 %1502
  %1504 = vrot.lane.b32.xlu0 %v912, 112
  %v1505 = vpop.permute.xlu0 %1504
  %v1506 = vsel %vm702, %v1503, %v1505
  %v1507 = vsel %vm702, %v1505, %v1503
  %v1508 = vmul.f32 %v1506, %v709
  %v1509 = vmul.f32 %v1507, %v713
  %s1510 = scalar_lea.vmem %s3, 56
  %v1511 = vld [vmem:[%s1510] sm:$0xff]
  %v1513 = vsel %vm59, %v1511, 0
  %1515 = vmatprep.subr.mxu0 %v1509
  %1516 = vmatpush1.msra.mxu0 %v1508
  %1517 = vmatprep.subr.mxu0 0.0
  %1518 = vmatpush1.msra.mxu0 0.0
  %1519 = vmatprep.subr.mxu0 0.0
  %1520 = vmatpush1.msra.mxu0 0.0
  %1521 = vmatprep.subr.mxu0 0.0
  %1522 = vmatpush1.msra.mxu0 0.0
  %1523 = vmatprep.subr.mxu0 0.0
  %1524 = vmatpush1.msra.mxu0 0.0
  %1525 = vmatprep.subr.mxu0 0.0
  %1526 = vmatpush1.msra.mxu0 0.0
  %1527 = vmatprep.subr.mxu0 0.0
  %1528 = vmatpush1.msra.mxu0 0.0
  %1529 = vmatprep.subr.mxu0 0.0
  %1530 = vmatpush1.msra.mxu0 0.0
  %1531 = vmatprep.subr.mxu0 0.0
  %1532 = vmatpush1.msra.mxu0 0.0
  %1533 = vmatprep.subr.mxu0 0.0
  %1534 = vmatpush1.msra.mxu0 0.0
  %1535 = vmatprep.subr.mxu0 0.0
  %1536 = vmatpush1.msra.mxu0 0.0
  %1537 = vmatprep.subr.mxu0 0.0
  %1538 = vmatpush1.msra.mxu0 0.0
  %1539 = vmatprep.subr.mxu0 0.0
  %1540 = vmatpush1.msra.mxu0 0.0
  %1541 = vmatprep.subr.mxu0 0.0
  %1542 = vmatpush1.msra.mxu0 0.0
  %1543 = vmatprep.subr.mxu0 0.0
  %1544 = vmatpush1.msra.mxu0 0.0
  %1545 = vmatprep.subr.mxu0 0.0
  %1546 = vmatpush1.msra.mxu0 0.0
  %1547 = vmatprep.subr.mxu0 0.0
  %1548 = vmatpush1.msra.mxu0 0.0
  %1549 = vmatprep.subr.mxu0 0.0
  %1550 = vmatpush1.msra.mxu0 0.0
  %1551 = vmatprep.subr.mxu0 0.0
  %1552 = vmatpush1.msra.mxu0 0.0
  %1553 = vmatprep.subr.mxu0 0.0
  %1554 = vmatpush1.msra.mxu0 0.0
  %1555 = vmatprep.subr.mxu0 0.0
  %1556 = vmatpush1.msra.mxu0 0.0
  %1557 = vmatprep.subr.mxu0 0.0
  %1558 = vmatpush1.msra.mxu0 0.0
  %1559 = vmatprep.subr.mxu0 0.0
  %1560 = vmatpush1.msra.mxu0 0.0
  %1561 = vmatprep.subr.mxu0 0.0
  %1562 = vmatpush1.msra.mxu0 0.0
  %1563 = vmatprep.subr.mxu0 0.0
  %1564 = vmatpush1.msra.mxu0 0.0
  %1565 = vmatprep.subr.mxu0 0.0
  %1566 = vmatpush1.msra.mxu0 0.0
  %1567 = vmatprep.subr.mxu0 0.0
  %1568 = vmatpush1.msra.mxu0 0.0
  %1569 = vmatprep.subr.mxu0 0.0
  %1570 = vmatpush1.msra.mxu0 0.0
  %1571 = vmatprep.subr.mxu0 0.0
  %1572 = vmatpush1.msra.mxu0 0.0
  %1573 = vmatprep.subr.mxu0 0.0
  %1574 = vmatpush1.msra.mxu0 0.0
  %1575 = vmatprep.subr.mxu0 0.0
  %1576 = vmatpush1.msra.mxu0 0.0
  %1577 = vmatprep.subr.mxu0 0.0
  %1578 = vmatpush1.msra.mxu0 0.0
  %1579 = vmatprep.mubr.f32.mxu0 0.0
  %1580 = vmatmul.mubr.f32.gmra.mrb[0].mxu0 %v1513
  %v1581 = vpop.f32.mrb[0].mxu0
  %v1582 = vadd.f32 0.0, %v1581
  %v1583 = vpop.f32.mrb[0].mxu0
  %v1584 = vadd.f32 0.0, %v1583
  %1585 = vdwg.mxu0
  %v1586 = vadd.f32 %v1500, %v1582
  %v1587 = vadd.f32 %v1501, %v1584
  %1588 = vrot.lane.b32.xlu0 %v911, 111
  %v1589 = vpop.permute.xlu0 %1588
  %1590 = vrot.lane.b32.xlu0 %v912, 111
  %v1591 = vpop.permute.xlu0 %1590
  %v1592 = vsel %vm800, %v1589, %v1591
  %v1593 = vsel %vm800, %v1591, %v1589
  %v1594 = vmul.f32 %v1592, %v807
  %v1595 = vmul.f32 %v1593, %v811
  %s1596 = scalar_lea.vmem %s3, 64
  %v1597 = vld [vmem:[%s1596] sm:$0xff]
  %v1599 = vsel %vm59, %v1597, 0
  %1601 = vmatprep.subr.mxu0 %v1595
  %1602 = vmatpush1.msra.mxu0 %v1594
  %1603 = vmatprep.subr.mxu0 0.0
  %1604 = vmatpush1.msra.mxu0 0.0
  %1605 = vmatprep.subr.mxu0 0.0
  %1606 = vmatpush1.msra.mxu0 0.0
  %1607 = vmatprep.subr.mxu0 0.0
  %1608 = vmatpush1.msra.mxu0 0.0
  %1609 = vmatprep.subr.mxu0 0.0
  %1610 = vmatpush1.msra.mxu0 0.0
  %1611 = vmatprep.subr.mxu0 0.0
  %1612 = vmatpush1.msra.mxu0 0.0
  %1613 = vmatprep.subr.mxu0 0.0
  %1614 = vmatpush1.msra.mxu0 0.0
  %1615 = vmatprep.subr.mxu0 0.0
  %1616 = vmatpush1.msra.mxu0 0.0
  %1617 = vmatprep.subr.mxu0 0.0
  %1618 = vmatpush1.msra.mxu0 0.0
  %1619 = vmatprep.subr.mxu0 0.0
  %1620 = vmatpush1.msra.mxu0 0.0
  %1621 = vmatprep.subr.mxu0 0.0
  %1622 = vmatpush1.msra.mxu0 0.0
  %1623 = vmatprep.subr.mxu0 0.0
  %1624 = vmatpush1.msra.mxu0 0.0
  %1625 = vmatprep.subr.mxu0 0.0
  %1626 = vmatpush1.msra.mxu0 0.0
  %1627 = vmatprep.subr.mxu0 0.0
  %1628 = vmatpush1.msra.mxu0 0.0
  %1629 = vmatprep.subr.mxu0 0.0
  %1630 = vmatpush1.msra.mxu0 0.0
  %1631 = vmatprep.subr.mxu0 0.0
  %1632 = vmatpush1.msra.mxu0 0.0
  %1633 = vmatprep.subr.mxu0 0.0
  %1634 = vmatpush1.msra.mxu0 0.0
  %1635 = vmatprep.subr.mxu0 0.0
  %1636 = vmatpush1.msra.mxu0 0.0
  %1637 = vmatprep.subr.mxu0 0.0
  %1638 = vmatpush1.msra.mxu0 0.0
  %1639 = vmatprep.subr.mxu0 0.0
  %1640 = vmatpush1.msra.mxu0 0.0
  %1641 = vmatprep.subr.mxu0 0.0
  %1642 = vmatpush1.msra.mxu0 0.0
  %1643 = vmatprep.subr.mxu0 0.0
  %1644 = vmatpush1.msra.mxu0 0.0
  %1645 = vmatprep.subr.mxu0 0.0
  %1646 = vmatpush1.msra.mxu0 0.0
  %1647 = vmatprep.subr.mxu0 0.0
  %1648 = vmatpush1.msra.mxu0 0.0
  %1649 = vmatprep.subr.mxu0 0.0
  %1650 = vmatpush1.msra.mxu0 0.0
  %1651 = vmatprep.subr.mxu0 0.0
  %1652 = vmatpush1.msra.mxu0 0.0
  %1653 = vmatprep.subr.mxu0 0.0
  %1654 = vmatpush1.msra.mxu0 0.0
  %1655 = vmatprep.subr.mxu0 0.0
  %1656 = vmatpush1.msra.mxu0 0.0
  %1657 = vmatprep.subr.mxu0 0.0
  %1658 = vmatpush1.msra.mxu0 0.0
  %1659 = vmatprep.subr.mxu0 0.0
  %1660 = vmatpush1.msra.mxu0 0.0
  %1661 = vmatprep.subr.mxu0 0.0
  %1662 = vmatpush1.msra.mxu0 0.0
  %1663 = vmatprep.subr.mxu0 0.0
  %1664 = vmatpush1.msra.mxu0 0.0
  %1665 = vmatprep.mubr.f32.mxu0 0.0
  %1666 = vmatmul.mubr.f32.gmra.mrb[0].mxu0 %v1599
  %v1667 = vpop.f32.mrb[0].mxu0
  %v1668 = vadd.f32 0.0, %v1667
  %v1669 = vpop.f32.mrb[0].mxu0
  %v1670 = vadd.f32 0.0, %v1669
  %1671 = vdwg.mxu0
  %v1672 = vadd.f32 %v1586, %v1668
  %v1673 = vadd.f32 %v1587, %v1670
  %v1674 = vadd.f32 %v1672, %v1673
  %1675 = vadd.xlane.f32.xlu0 %v1674
  %v1676 = vpop.xlane.xlu0 %1675
  %v1677 = vmul.f32 %v1676, %v897
  %v1678 = vsub.f32 %v1672, %v1677
  %v1679 = vsub.f32 %v1673, %v1677
  %v1680 = vmul.f32 %v1678, %v1678
  %v1681 = vmul.f32 %v1679, %v1679
  %v1682 = vadd.f32 %v1680, %v1681
  %1683 = vadd.xlane.f32.xlu0 %v1682
  %v1684 = vpop.xlane.xlu0 %1683
  %v1685 = vmul.f32 %v1684, %v897
  %v1686 = vadd.f32 %v1685, 1e-05
  %v1687 = vrsqrt.pop %v1686
  %v1688 = vmul.f32 %v1678, %v1687
  %v1689 = vmul.f32 %v1679, %v1687
  %v1690 = vadd.f32 %v17, %v1688
  %v1691 = vadd.f32 %v18, %v1689
  %1692 = vst [vmem:[%s4] sm:$0xff] %v1690
  %1693 = vst [vmem:[%s4 + $0x8] sm:$0xff] %v1691
  // Predicated region
  $region18: #{_residual_block_impl.1} parent=0 // pred_check
    _
  $region19: #{_residual_block_impl.1} parent=0 // pred_check_branch
    %1695 = sbr.rel (0) target = $region21
  $region20: #{_residual_block_impl.1} parent=0 // pred_region
    _
  $region21: #{_residual_block_impl.1} parent=0 // pred_fallthru
    _
  // Predicated region
  $region22: #{_residual_block_impl.1} parent=0 // pred_check
    _
  $region23: #{_residual_block_impl.1} parent=0 // pred_check_branch
    %1697 = sbr.rel (0) target = $region25
  $region24: #{_residual_block_impl.1} parent=0 // pred_region
    _
  $region25: #{_residual_block_impl.1} parent=0 // pred_fallthru
    _

</llo_original>
